<compile_context>
chip_gen: v7x
topology: tpu7x:2x2x1
jax: 0.10.0
libtpu: 0.0.40
codegen_flags: <defaults>
</compile_context>

<pallas_src>
import jax
import jax.numpy as jnp
from jax.experimental import pallas as pl
from jax.experimental.pallas import tpu as pltpu

LEAKY_SLOPE = 0.1
BN_EPS = 1e-5
LANE = 128
ROWS_TARGET = 1024          # target M (= TH*Wo) rows fed to each MXU call


def _round_up(x, m):
    return (x + m - 1) // m * m


def _vmem_capacity_bytes():
    try:
        return int(pltpu.get_tpu_info().vmem_capacity_bytes)
    except Exception:
        return 64 * 1024 * 1024          # conservative fallback (v7x per-TC VMEM)


def _tile_vmem_bytes(rows, cols, itemsize):
    """Bytes of one (rows, cols) slab after padding to the TPU (sublane, lane) tiling."""
    sub = max(8, 32 // itemsize)          # f32 -> 8 sublanes, bf16 -> 16
    return _round_up(max(rows, 1), sub) * _round_up(max(cols, 1), LANE) * itemsize


def _vmem_estimate(th, wo, cin, cp, cout, wev, wod):
    """Rough per-step VMEM footprint (double-buffered streams + resident operands)."""
    act = 4 * th * (_tile_vmem_bytes(wev, cin, 2) + _tile_vmem_bytes(wod, cin, 2))
    halo = 2 * (_tile_vmem_bytes(wev, cin, 2) + _tile_vmem_bytes(wod, cin, 2))
    wgt = 2 * 9 * _tile_vmem_bytes(cin, cp, 2)
    bias = 2 * _tile_vmem_bytes(1, cp, 4)
    outb = 2 * th * _tile_vmem_bytes(wo, cout, 2)
    acc = _tile_vmem_bytes(th * wo, cp, 4)
    return act + halo + wgt + bias + outb + acc


def _choose_row_tile(ho, wo, cin, cp, cout, wev, wod, budget):
    """Largest divisor of Ho that hits the rows target and fits the VMEM budget."""
    divisors = [d for d in range(ho, 0, -1) if ho % d == 0]
    target = max(1, ROWS_TARGET // max(wo, 1))
    cands = [d for d in divisors if d <= target] or [1]
    for th in cands:
        if _vmem_estimate(th, wo, cin, cp, cout, wev, wod) <= budget:
            return th
    return 1


# ---------------------------------------------------------------------------
# Pallas kernel: fused in-kernel im2col matmul + folded-BN bias + LeakyReLU
# ---------------------------------------------------------------------------
def _make_fused_kernel(th, wo, cin, cp, cout):
    m = th * wo

    def kernel(w_ref, b_ref, ee_b, ee_h, eo_b, eo_h, oe_b, oo_b, o_ref, acc_ref):
        # w_ref  : (9, Cin, Cp)     bf16 folded conv weights (BN scale folded in)
        # b_ref  : (1, Cp)          f32 folded BN bias
        # *_b    : (1, TH, W, Cin)  bf16 parity-plane body rows (streamed)
        # *_h    : (1, 1, W, Cin)   bf16 halo row (plane row TH*(t+1))
        # o_ref  : (1, TH, Wo, Cout) bf16 output tile
        # acc_ref: (TH*Wo, Cp)      f32 accumulator scratch
        planes = {0: (ee_b, ee_h, oe_b),          # W-even parity planes
                  1: (eo_b, eo_h, oo_b)}          # W-odd  parity planes
        kw_cols = {0: (0, 0), 1: (1, 0), 2: (0, 1)}   # kw -> (W parity, col offset)

        first = True
        for kh in range(3):
            for kw in range(3):
                par, c0 = kw_cols[kw]
                even_body, even_halo, odd_body = planes[par]
                if kh == 0:      # padded row 2*oh   -> even-H plane rows [0, TH)
                    xs = even_body[0, :, c0:c0 + wo, :]
                elif kh == 1:    # padded row 2*oh+1 -> odd-H plane rows [0, TH)
                    xs = odd_body[0, :, c0:c0 + wo, :]
                else:            # padded row 2*oh+2 -> even-H plane rows [1, TH]
                    if th == 1:
                        xs = even_halo[0, :, c0:c0 + wo, :]
                    else:
                        xs = jnp.concatenate(
                            [even_body[0, 1:th, c0:c0 + wo, :],
                             even_halo[0, :, c0:c0 + wo, :]], axis=0)
                part = jnp.dot(xs.reshape(m, cin), w_ref[kh * 3 + kw],
                               preferred_element_type=jnp.float32)
                if first:
                    acc_ref[...] = part
                    first = False
                else:
                    acc_ref[...] += part

        y = acc_ref[...] + b_ref[...]
        y = jnp.maximum(y, LEAKY_SLOPE * y)               # LeakyReLU(0.1)
        o_ref[0] = y[:, :cout].astype(o_ref.dtype).reshape(th, wo, cout)

    return kernel


# ---------------------------------------------------------------------------
# Layer forward passes
# ---------------------------------------------------------------------------
def downsampling_layer_apply_nhwc(x_nhwc, params):
    """Fused conv3x3/s2/p1 + folded eval-BN + LeakyReLU.  NHWC in -> NHWC bf16 out."""
    w = params["w"]                                      # (Cout, Cin, 3, 3)
    cout, cin = int(w.shape[0]), int(w.shape[1])
    n, h, wdt, c = (int(s) for s in x_nhwc.shape)
    assert c == cin, (c, cin)
    ho = (h + 2 - 3) // 2 + 1
    wo = (wdt + 2 - 3) // 2 + 1

    # Fold eval-mode BatchNorm: scale into the weights, shift into the bias.
    scale = params["gamma"] * jax.lax.rsqrt(params["var"] + BN_EPS)
    bias = params["beta"] - params["mean"] * scale
    cp = _round_up(cout, LANE)                           # lane-padded accumulator width
    w9 = (jnp.transpose(w, (2, 3, 1, 0)) * scale).reshape(9, cin, cout)
    w9 = jnp.pad(w9, ((0, 0), (0, 0), (0, cp - cout))).astype(jnp.bfloat16)
    bias_p = jnp.pad(bias, (0, cp - cout)).reshape(1, cp).astype(jnp.float32)

    # Space-to-depth parity planes of the zero-padded input.  The four planes
    # together are exactly one bf16 copy of x; the 3x3/stride-2 im2col gather
    # happens inside the kernel (no 2.25x-inflated patch tensor in HBM).
    xp = jnp.pad(x_nhwc.astype(jnp.bfloat16), ((0, 0), (1, 1), (1, 1), (0, 0)))
    x_ee = xp[:, 0::2, 0::2, :]
    x_eo = xp[:, 0::2, 1::2, :]
    x_oe = xp[:, 1::2, 0::2, :]
    x_oo = xp[:, 1::2, 1::2, :]
    wev = int(x_ee.shape[2])
    wod = int(x_eo.shape[2])

    # Per-generation tiling / VMEM budget (v5e & v6e: 128 MiB, v7x: 64 MiB / TC).
    cap = _vmem_capacity_bytes()
    budget = (3 * cap) // 4
    th = _choose_row_tile(ho, wo, cin, cp, cout, wev, wod, budget)
    ht = ho // th
    est = _vmem_estimate(th, wo, cin, cp, cout, wev, wod)
    vmem_limit = max(32 * 1024 * 1024, min(budget, int(est * 1.5)))

    kernel = _make_fused_kernel(th, wo, cin, cp, cout)

    def body_spec(width):
        return pl.BlockSpec((1, th, width, cin), lambda i, t: (i, t, 0, 0))

    def halo_spec(width):
        # Single plane row TH*(t+1): the +1-row halo needed by kernel row kh=2.
        return pl.BlockSpec((1, 1, width, cin),
                            lambda i, t: (i, th * (t + 1), 0, 0))

    return pl.pallas_call(
        kernel,
        out_shape=jax.ShapeDtypeStruct((n, ho, wo, cout), jnp.bfloat16),
        grid=(n, ht),
        in_specs=[
            pl.BlockSpec((9, cin, cp), lambda i, t: (0, 0, 0)),  # resident weights
            pl.BlockSpec((1, cp), lambda i, t: (0, 0)),          # resident bias
            body_spec(wev), halo_spec(wev),                      # x_ee body + halo
            body_spec(wod), halo_spec(wod),                      # x_eo body + halo
            body_spec(wev),                                      # x_oe body
            body_spec(wod),                                      # x_oo body
        ],
        out_specs=pl.BlockSpec((1, th, wo, cout), lambda i, t: (i, t, 0, 0)),
        scratch_shapes=[pltpu.VMEM((th * wo, cp), jnp.float32)],
        compiler_params=pltpu.CompilerParams(
            dimension_semantics=("parallel", "parallel"),
            vmem_limit_bytes=vmem_limit,
        ),
    )(w9, bias_p, x_ee, x_ee, x_eo, x_eo, x_oe, x_oo)


def downsampling_layer_apply(x_nchw, params):
    """torch DownsamplingLayer-compatible interface: NCHW in -> NCHW (bf16) out."""
    y_nhwc = downsampling_layer_apply_nhwc(jnp.transpose(x_nchw, (0, 2, 3, 1)), params)
    # TODO(synk): when chaining darknet layers, keep the NHWC bf16 tensor and only
    #             convert layout at the network boundary (this transpose is an
    #             extra pass kept solely for torch-module interface parity).
    return jnp.transpose(y_nhwc, (0, 3, 1, 2))


# ---------------------------------------------------------------------------
# Deterministic synthetic parameters (matches nn.Conv2d / BatchNorm2d shapes)
# ---------------------------------------------------------------------------
def init_downsampling_layer(key, in_channels, out_channels):
    kw, kg, kb, km, kv = jax.random.split(key, 5)
    return dict(
        w=0.1 * jax.random.normal(kw, (out_channels, in_channels, 3, 3), jnp.float32),
        gamma=1.0 + 0.1 * jax.random.normal(kg, (out_channels,), jnp.float32),
        beta=0.1 * jax.random.normal(kb, (out_channels,), jnp.float32),
        mean=0.1 * jax.random.normal(km, (out_channels,), jnp.float32),
        var=jax.random.uniform(kv, (out_channels,), jnp.float32, 0.5, 1.5),
    )


# ---------------------------------------------------------------------------
# Pure-JAX reference (bf16=True mirrors the kernel's operand quantization)
# ---------------------------------------------------------------------------
def _ref_downsampling_layer(x_nchw, params, *, bf16):
    w = params["w"]
    scale = params["gamma"] / jnp.sqrt(params["var"] + BN_EPS)
    bias = params["beta"] - params["mean"] * scale
    w_folded = jnp.transpose(w, (2, 3, 1, 0)) * scale      # (kh, kw, cin, cout)
    x = jnp.transpose(x_nchw, (0, 2, 3, 1))
    if bf16:
        x = x.astype(jnp.bfloat16)
        w_folded = w_folded.astype(jnp.bfloat16)
    y = jax.lax.conv_general_dilated(
        x, w_folded, window_strides=(2, 2), padding=((1, 1), (1, 1)),
        dimension_numbers=("NHWC", "HWIO", "NHWC"),
        preferred_element_type=jnp.float32)
    y = y + bias
    y = jnp.maximum(y, LEAKY_SLOPE * y)
    return jnp.transpose(y, (0, 3, 1, 2))


if __name__ == "__main__":
    key = jax.random.PRNGKey(0)
    kx, kp = jax.random.split(key)

    N, Cin, H, W = 2, 4, 16, 16                            # NCHW, like the module
    Cout = 8
    x = jax.random.normal(kx, (N, Cin, H, W), jnp.float32)
    params = init_downsampling_layer(kp, Cin, Cout)

    apply_fn = jax.jit(downsampling_layer_apply)
    out = jax.block_until_ready(apply_fn(x, params))
    assert out.shape == (N, Cout, H // 2, W // 2), out.shape
    out_f32 = out.astype(jnp.float32)

    # Tight check vs a reference with the same bf16 operand quantization
    # (the kernel additionally rounds its output to bf16).
    ref_bf16 = jax.block_until_ready(_ref_downsampling_layer(x, params, bf16=True))
    err = float(jnp.max(jnp.abs(out_f32 - ref_bf16)))
    if err > 5e-2:
        raise AssertionError(f"Pallas mismatch vs bf16 reference: max abs err {err}")

    # Loose sanity check against full-precision module semantics.
    ref_f32 = jax.block_until_ready(_ref_downsampling_layer(x, params, bf16=False))
    err32 = float(jnp.max(jnp.abs(out_f32 - ref_f32)))
    if err32 > 1.5e-1:
        raise AssertionError(f"Pallas mismatch vs f32 reference: max abs err {err32}")

    print("KERNEL_OK")
</pallas_src>

<mosaic_0001>
module attributes {stable_mosaic.version = 11 : i64} {
  func.func @kernel(%arg0: i32, %arg1: i32, %arg2: memref<9x4x128xbf16, #tpu.memory_space<vmem>>, %arg3: memref<1x128xf32, #tpu.memory_space<vmem>>, %arg4: memref<1x8x9x4xbf16, #tpu.memory_space<vmem>>, %arg5: memref<1x1x9x4xbf16, #tpu.memory_space<vmem>>, %arg6: memref<1x8x9x4xbf16, #tpu.memory_space<vmem>>, %arg7: memref<1x1x9x4xbf16, #tpu.memory_space<vmem>>, %arg8: memref<1x8x9x4xbf16, #tpu.memory_space<vmem>>, %arg9: memref<1x8x9x4xbf16, #tpu.memory_space<vmem>>, %arg10: memref<1x8x8x8xbf16, #tpu.memory_space<vmem>>, %arg11: memref<64x128xf32, #tpu.memory_space<vmem>>) attributes {dimension_semantics = [#tpu.dimension_semantics<parallel>, #tpu.dimension_semantics<parallel>], iteration_bounds = array<i64: 2, 1>, scalar_prefetch = 0 : i64, scratch_operands = 1 : i64, tpu.core_type = #tpu.core_type<tc>, window_params = [{pipeline_mode = #tpu.pipeline_mode<synchronous>, transform_indices = @transform_0, window_bounds = array<i64: 9, 4, 128>}, {pipeline_mode = #tpu.pipeline_mode<synchronous>, transform_indices = @transform_1, window_bounds = array<i64: 1, 128>}, {transform_indices = @transform_2, window_bounds = array<i64: 1, 8, 9, 4>}, {transform_indices = @transform_3, window_bounds = array<i64: 1, 1, 9, 4>}, {transform_indices = @transform_4, window_bounds = array<i64: 1, 8, 9, 4>}, {transform_indices = @transform_5, window_bounds = array<i64: 1, 1, 9, 4>}, {transform_indices = @transform_6, window_bounds = array<i64: 1, 8, 9, 4>}, {transform_indices = @transform_7, window_bounds = array<i64: 1, 8, 9, 4>}, {transform_indices = @transform_8, window_bounds = array<i64: 1, 8, 8, 8>}]} {
    %c0 = arith.constant 0 : index
    %c0_0 = arith.constant 0 : index
    %c0_1 = arith.constant 0 : index
    %c0_2 = arith.constant 0 : index
    %0 = vector.load %arg4[%c0, %c0_0, %c0_1, %c0_2] : memref<1x8x9x4xbf16, #tpu.memory_space<vmem>>, vector<1x8x8x4xbf16>
    %1 = vector.shape_cast %0 : vector<1x8x8x4xbf16> to vector<8x8x4xbf16>
    %2 = vector.shape_cast %1 : vector<8x8x4xbf16> to vector<64x4xbf16>
    %c0_3 = arith.constant 0 : index
    %c0_4 = arith.constant 0 : index
    %c0_5 = arith.constant 0 : index
    %3 = vector.load %arg2[%c0_3, %c0_4, %c0_5] : memref<9x4x128xbf16, #tpu.memory_space<vmem>>, vector<1x4x128xbf16>
    %4 = vector.shape_cast %3 : vector<1x4x128xbf16> to vector<4x128xbf16>
    %cst = arith.constant dense<0.000000e+00> : vector<64x128xf32>
    %5 = tpu.matmul %2, %4, %cst {dimension_numbers = #tpu.dot_dimension_numbers<[1], [0], [0], [1], [0, 0, 1, 1], [], []>} : vector<64x4xbf16>, vector<4x128xbf16>, vector<64x128xf32> -> vector<64x128xf32>
    %c0_6 = arith.constant 0 : index
    %c0_7 = arith.constant 0 : index
    %6 = vector.load %arg11[%c0_6, %c0_7] : memref<64x128xf32, #tpu.memory_space<vmem>>, vector<64x128xf32>
    tpu.vector_store %arg11[%c0_6, %c0_7], %5 {strides = array<i32>} : memref<64x128xf32, #tpu.memory_space<vmem>>, vector<64x128xf32>,
    %c0_8 = arith.constant 0 : index
    %c0_9 = arith.constant 0 : index
    %c0_10 = arith.constant 0 : index
    %c0_11 = arith.constant 0 : index
    %7 = vector.load %arg6[%c0_8, %c0_9, %c0_10, %c0_11] : memref<1x8x9x4xbf16, #tpu.memory_space<vmem>>, vector<1x8x8x4xbf16>
    %8 = vector.shape_cast %7 : vector<1x8x8x4xbf16> to vector<8x8x4xbf16>
    %9 = vector.shape_cast %8 : vector<8x8x4xbf16> to vector<64x4xbf16>
    %c1 = arith.constant 1 : index
    %c0_12 = arith.constant 0 : index
    %c0_13 = arith.constant 0 : index
    %10 = vector.load %arg2[%c1, %c0_12, %c0_13] : memref<9x4x128xbf16, #tpu.memory_space<vmem>>, vector<1x4x128xbf16>
    %11 = vector.shape_cast %10 : vector<1x4x128xbf16> to vector<4x128xbf16>
    %cst_14 = arith.constant dense<0.000000e+00> : vector<64x128xf32>
    %12 = tpu.matmul %9, %11, %cst_14 {dimension_numbers = #tpu.dot_dimension_numbers<[1], [0], [0], [1], [0, 0, 1, 1], [], []>} : vector<64x4xbf16>, vector<4x128xbf16>, vector<64x128xf32> -> vector<64x128xf32>
    %c0_15 = arith.constant 0 : index
    %c0_16 = arith.constant 0 : index
    %13 = vector.load %arg11[%c0_15, %c0_16] : memref<64x128xf32, #tpu.memory_space<vmem>>, vector<64x128xf32>
    %14 = arith.addf %13, %12 : vector<64x128xf32>
    %c0_17 = arith.constant 0 : index
    %c0_18 = arith.constant 0 : index
    %15 = vector.load %arg11[%c0_17, %c0_18] : memref<64x128xf32, #tpu.memory_space<vmem>>, vector<64x128xf32>
    tpu.vector_store %arg11[%c0_17, %c0_18], %14 {strides = array<i32>} : memref<64x128xf32, #tpu.memory_space<vmem>>, vector<64x128xf32>,
    %c0_19 = arith.constant 0 : index
    %c0_20 = arith.constant 0 : index
    %c1_21 = arith.constant 1 : index
    %c0_22 = arith.constant 0 : index
    %16 = vector.load %arg4[%c0_19, %c0_20, %c1_21, %c0_22] : memref<1x8x9x4xbf16, #tpu.memory_space<vmem>>, vector<1x8x8x4xbf16>
    %17 = vector.shape_cast %16 : vector<1x8x8x4xbf16> to vector<8x8x4xbf16>
    %18 = vector.shape_cast %17 : vector<8x8x4xbf16> to vector<64x4xbf16>
    %c2 = arith.constant 2 : index
    %c0_23 = arith.constant 0 : index
    %c0_24 = arith.constant 0 : index
    %19 = vector.load %arg2[%c2, %c0_23, %c0_24] : memref<9x4x128xbf16, #tpu.memory_space<vmem>>, vector<1x4x128xbf16>
    %20 = vector.shape_cast %19 : vector<1x4x128xbf16> to vector<4x128xbf16>
    %cst_25 = arith.constant dense<0.000000e+00> : vector<64x128xf32>
    %21 = tpu.matmul %18, %20, %cst_25 {dimension_numbers = #tpu.dot_dimension_numbers<[1], [0], [0], [1], [0, 0, 1, 1], [], []>} : vector<64x4xbf16>, vector<4x128xbf16>, vector<64x128xf32> -> vector<64x128xf32>
    %c0_26 = arith.constant 0 : index
    %c0_27 = arith.constant 0 : index
    %22 = vector.load %arg11[%c0_26, %c0_27] : memref<64x128xf32, #tpu.memory_space<vmem>>, vector<64x128xf32>
    %23 = arith.addf %22, %21 : vector<64x128xf32>
    %c0_28 = arith.constant 0 : index
    %c0_29 = arith.constant 0 : index
    %24 = vector.load %arg11[%c0_28, %c0_29] : memref<64x128xf32, #tpu.memory_space<vmem>>, vector<64x128xf32>
    tpu.vector_store %arg11[%c0_28, %c0_29], %23 {strides = array<i32>} : memref<64x128xf32, #tpu.memory_space<vmem>>, vector<64x128xf32>,
    %c0_30 = arith.constant 0 : index
    %c0_31 = arith.constant 0 : index
    %c0_32 = arith.constant 0 : index
    %c0_33 = arith.constant 0 : index
    %25 = vector.load %arg8[%c0_30, %c0_31, %c0_32, %c0_33] : memref<1x8x9x4xbf16, #tpu.memory_space<vmem>>, vector<1x8x8x4xbf16>
    %26 = vector.shape_cast %25 : vector<1x8x8x4xbf16> to vector<8x8x4xbf16>
    %27 = vector.shape_cast %26 : vector<8x8x4xbf16> to vector<64x4xbf16>
    %c3 = arith.constant 3 : index
    %c0_34 = arith.constant 0 : index
    %c0_35 = arith.constant 0 : index
    %28 = vector.load %arg2[%c3, %c0_34, %c0_35] : memref<9x4x128xbf16, #tpu.memory_space<vmem>>, vector<1x4x128xbf16>
    %29 = vector.shape_cast %28 : vector<1x4x128xbf16> to vector<4x128xbf16>
    %cst_36 = arith.constant dense<0.000000e+00> : vector<64x128xf32>
    %30 = tpu.matmul %27, %29, %cst_36 {dimension_numbers = #tpu.dot_dimension_numbers<[1], [0], [0], [1], [0, 0, 1, 1], [], []>} : vector<64x4xbf16>, vector<4x128xbf16>, vector<64x128xf32> -> vector<64x128xf32>
    %c0_37 = arith.constant 0 : index
    %c0_38 = arith.constant 0 : index
    %31 = vector.load %arg11[%c0_37, %c0_38] : memref<64x128xf32, #tpu.memory_space<vmem>>, vector<64x128xf32>
    %32 = arith.addf %31, %30 : vector<64x128xf32>
    %c0_39 = arith.constant 0 : index
    %c0_40 = arith.constant 0 : index
    %33 = vector.load %arg11[%c0_39, %c0_40] : memref<64x128xf32, #tpu.memory_space<vmem>>, vector<64x128xf32>
    tpu.vector_store %arg11[%c0_39, %c0_40], %32 {strides = array<i32>} : memref<64x128xf32, #tpu.memory_space<vmem>>, vector<64x128xf32>,
    %c0_41 = arith.constant 0 : index
    %c0_42 = arith.constant 0 : index
    %c0_43 = arith.constant 0 : index
    %c0_44 = arith.constant 0 : index
    %34 = vector.load %arg9[%c0_41, %c0_42, %c0_43, %c0_44] : memref<1x8x9x4xbf16, #tpu.memory_space<vmem>>, vector<1x8x8x4xbf16>
    %35 = vector.shape_cast %34 : vector<1x8x8x4xbf16> to vector<8x8x4xbf16>
    %36 = vector.shape_cast %35 : vector<8x8x4xbf16> to vector<64x4xbf16>
    %c4 = arith.constant 4 : index
    %c0_45 = arith.constant 0 : index
    %c0_46 = arith.constant 0 : index
    %37 = vector.load %arg2[%c4, %c0_45, %c0_46] : memref<9x4x128xbf16, #tpu.memory_space<vmem>>, vector<1x4x128xbf16>
    %38 = vector.shape_cast %37 : vector<1x4x128xbf16> to vector<4x128xbf16>
    %cst_47 = arith.constant dense<0.000000e+00> : vector<64x128xf32>
    %39 = tpu.matmul %36, %38, %cst_47 {dimension_numbers = #tpu.dot_dimension_numbers<[1], [0], [0], [1], [0, 0, 1, 1], [], []>} : vector<64x4xbf16>, vector<4x128xbf16>, vector<64x128xf32> -> vector<64x128xf32>
    %c0_48 = arith.constant 0 : index
    %c0_49 = arith.constant 0 : index
    %40 = vector.load %arg11[%c0_48, %c0_49] : memref<64x128xf32, #tpu.memory_space<vmem>>, vector<64x128xf32>
    %41 = arith.addf %40, %39 : vector<64x128xf32>
    %c0_50 = arith.constant 0 : index
    %c0_51 = arith.constant 0 : index
    %42 = vector.load %arg11[%c0_50, %c0_51] : memref<64x128xf32, #tpu.memory_space<vmem>>, vector<64x128xf32>
    tpu.vector_store %arg11[%c0_50, %c0_51], %41 {strides = array<i32>} : memref<64x128xf32, #tpu.memory_space<vmem>>, vector<64x128xf32>,
    %c0_52 = arith.constant 0 : index
    %c0_53 = arith.constant 0 : index
    %c1_54 = arith.constant 1 : index
    %c0_55 = arith.constant 0 : index
    %43 = vector.load %arg8[%c0_52, %c0_53, %c1_54, %c0_55] : memref<1x8x9x4xbf16, #tpu.memory_space<vmem>>, vector<1x8x8x4xbf16>
    %44 = vector.shape_cast %43 : vector<1x8x8x4xbf16> to vector<8x8x4xbf16>
    %45 = vector.shape_cast %44 : vector<8x8x4xbf16> to vector<64x4xbf16>
    %c5 = arith.constant 5 : index
    %c0_56 = arith.constant 0 : index
    %c0_57 = arith.constant 0 : index
    %46 = vector.load %arg2[%c5, %c0_56, %c0_57] : memref<9x4x128xbf16, #tpu.memory_space<vmem>>, vector<1x4x128xbf16>
    %47 = vector.shape_cast %46 : vector<1x4x128xbf16> to vector<4x128xbf16>
    %cst_58 = arith.constant dense<0.000000e+00> : vector<64x128xf32>
    %48 = tpu.matmul %45, %47, %cst_58 {dimension_numbers = #tpu.dot_dimension_numbers<[1], [0], [0], [1], [0, 0, 1, 1], [], []>} : vector<64x4xbf16>, vector<4x128xbf16>, vector<64x128xf32> -> vector<64x128xf32>
    %c0_59 = arith.constant 0 : index
    %c0_60 = arith.constant 0 : index
    %49 = vector.load %arg11[%c0_59, %c0_60] : memref<64x128xf32, #tpu.memory_space<vmem>>, vector<64x128xf32>
    %50 = arith.addf %49, %48 : vector<64x128xf32>
    %c0_61 = arith.constant 0 : index
    %c0_62 = arith.constant 0 : index
    %51 = vector.load %arg11[%c0_61, %c0_62] : memref<64x128xf32, #tpu.memory_space<vmem>>, vector<64x128xf32>
    tpu.vector_store %arg11[%c0_61, %c0_62], %50 {strides = array<i32>} : memref<64x128xf32, #tpu.memory_space<vmem>>, vector<64x128xf32>,
    %c0_63 = arith.constant 0 : index
    %c1_64 = arith.constant 1 : index
    %c0_65 = arith.constant 0 : index
    %c0_66 = arith.constant 0 : index
    %52 = vector.load %arg4[%c0_63, %c1_64, %c0_65, %c0_66] : memref<1x8x9x4xbf16, #tpu.memory_space<vmem>>, vector<1x7x8x4xbf16>
    %53 = vector.shape_cast %52 : vector<1x7x8x4xbf16> to vector<7x8x4xbf16>
    %c0_67 = arith.constant 0 : index
    %c0_68 = arith.constant 0 : index
    %c0_69 = arith.constant 0 : index
    %c0_70 = arith.constant 0 : index
    %54 = vector.load %arg5[%c0_67, %c0_68, %c0_69, %c0_70] : memref<1x1x9x4xbf16, #tpu.memory_space<vmem>>, vector<1x1x8x4xbf16>
    %55 = vector.shape_cast %54 : vector<1x1x8x4xbf16> to vector<1x8x4xbf16>
    %56 = tpu.concatenate %53, %55 in 0 : vector<7x8x4xbf16>, vector<1x8x4xbf16> -> vector<8x8x4xbf16>
    %57 = vector.shape_cast %56 : vector<8x8x4xbf16> to vector<64x4xbf16>
    %c6 = arith.constant 6 : index
    %c0_71 = arith.constant 0 : index
    %c0_72 = arith.constant 0 : index
    %58 = vector.load %arg2[%c6, %c0_71, %c0_72] : memref<9x4x128xbf16, #tpu.memory_space<vmem>>, vector<1x4x128xbf16>
    %59 = vector.shape_cast %58 : vector<1x4x128xbf16> to vector<4x128xbf16>
    %cst_73 = arith.constant dense<0.000000e+00> : vector<64x128xf32>
    %60 = tpu.matmul %57, %59, %cst_73 {dimension_numbers = #tpu.dot_dimension_numbers<[1], [0], [0], [1], [0, 0, 1, 1], [], []>} : vector<64x4xbf16>, vector<4x128xbf16>, vector<64x128xf32> -> vector<64x128xf32>
    %c0_74 = arith.constant 0 : index
    %c0_75 = arith.constant 0 : index
    %61 = vector.load %arg11[%c0_74, %c0_75] : memref<64x128xf32, #tpu.memory_space<vmem>>, vector<64x128xf32>
    %62 = arith.addf %61, %60 : vector<64x128xf32>
    %c0_76 = arith.constant 0 : index
    %c0_77 = arith.constant 0 : index
    %63 = vector.load %arg11[%c0_76, %c0_77] : memref<64x128xf32, #tpu.memory_space<vmem>>, vector<64x128xf32>
    tpu.vector_store %arg11[%c0_76, %c0_77], %62 {strides = array<i32>} : memref<64x128xf32, #tpu.memory_space<vmem>>, vector<64x128xf32>,
    %c0_78 = arith.constant 0 : index
    %c1_79 = arith.constant 1 : index
    %c0_80 = arith.constant 0 : index
    %c0_81 = arith.constant 0 : index
    %64 = vector.load %arg6[%c0_78, %c1_79, %c0_80, %c0_81] : memref<1x8x9x4xbf16, #tpu.memory_space<vmem>>, vector<1x7x8x4xbf16>
    %65 = vector.shape_cast %64 : vector<1x7x8x4xbf16> to vector<7x8x4xbf16>
    %c0_82 = arith.constant 0 : index
    %c0_83 = arith.constant 0 : index
    %c0_84 = arith.constant 0 : index
    %c0_85 = arith.constant 0 : index
    %66 = vector.load %arg7[%c0_82, %c0_83, %c0_84, %c0_85] : memref<1x1x9x4xbf16, #tpu.memory_space<vmem>>, vector<1x1x8x4xbf16>
    %67 = vector.shape_cast %66 : vector<1x1x8x4xbf16> to vector<1x8x4xbf16>
    %68 = tpu.concatenate %65, %67 in 0 : vector<7x8x4xbf16>, vector<1x8x4xbf16> -> vector<8x8x4xbf16>
    %69 = vector.shape_cast %68 : vector<8x8x4xbf16> to vector<64x4xbf16>
    %c7 = arith.constant 7 : index
    %c0_86 = arith.constant 0 : index
    %c0_87 = arith.constant 0 : index
    %70 = vector.load %arg2[%c7, %c0_86, %c0_87] : memref<9x4x128xbf16, #tpu.memory_space<vmem>>, vector<1x4x128xbf16>
    %71 = vector.shape_cast %70 : vector<1x4x128xbf16> to vector<4x128xbf16>
    %cst_88 = arith.constant dense<0.000000e+00> : vector<64x128xf32>
    %72 = tpu.matmul %69, %71, %cst_88 {dimension_numbers = #tpu.dot_dimension_numbers<[1], [0], [0], [1], [0, 0, 1, 1], [], []>} : vector<64x4xbf16>, vector<4x128xbf16>, vector<64x128xf32> -> vector<64x128xf32>
    %c0_89 = arith.constant 0 : index
    %c0_90 = arith.constant 0 : index
    %73 = vector.load %arg11[%c0_89, %c0_90] : memref<64x128xf32, #tpu.memory_space<vmem>>, vector<64x128xf32>
    %74 = arith.addf %73, %72 : vector<64x128xf32>
    %c0_91 = arith.constant 0 : index
    %c0_92 = arith.constant 0 : index
    %75 = vector.load %arg11[%c0_91, %c0_92] : memref<64x128xf32, #tpu.memory_space<vmem>>, vector<64x128xf32>
    tpu.vector_store %arg11[%c0_91, %c0_92], %74 {strides = array<i32>} : memref<64x128xf32, #tpu.memory_space<vmem>>, vector<64x128xf32>,
    %c0_93 = arith.constant 0 : index
    %c1_94 = arith.constant 1 : index
    %c1_95 = arith.constant 1 : index
    %c0_96 = arith.constant 0 : index
    %76 = vector.load %arg4[%c0_93, %c1_94, %c1_95, %c0_96] : memref<1x8x9x4xbf16, #tpu.memory_space<vmem>>, vector<1x7x8x4xbf16>
    %77 = vector.shape_cast %76 : vector<1x7x8x4xbf16> to vector<7x8x4xbf16>
    %c0_97 = arith.constant 0 : index
    %c0_98 = arith.constant 0 : index
    %c1_99 = arith.constant 1 : index
    %c0_100 = arith.constant 0 : index
    %78 = vector.load %arg5[%c0_97, %c0_98, %c1_99, %c0_100] : memref<1x1x9x4xbf16, #tpu.memory_space<vmem>>, vector<1x1x8x4xbf16>
    %79 = vector.shape_cast %78 : vector<1x1x8x4xbf16> to vector<1x8x4xbf16>
    %80 = tpu.concatenate %77, %79 in 0 : vector<7x8x4xbf16>, vector<1x8x4xbf16> -> vector<8x8x4xbf16>
    %81 = vector.shape_cast %80 : vector<8x8x4xbf16> to vector<64x4xbf16>
    %c8 = arith.constant 8 : index
    %c0_101 = arith.constant 0 : index
    %c0_102 = arith.constant 0 : index
    %82 = vector.load %arg2[%c8, %c0_101, %c0_102] : memref<9x4x128xbf16, #tpu.memory_space<vmem>>, vector<1x4x128xbf16>
    %83 = vector.shape_cast %82 : vector<1x4x128xbf16> to vector<4x128xbf16>
    %cst_103 = arith.constant dense<0.000000e+00> : vector<64x128xf32>
    %84 = tpu.matmul %81, %83, %cst_103 {dimension_numbers = #tpu.dot_dimension_numbers<[1], [0], [0], [1], [0, 0, 1, 1], [], []>} : vector<64x4xbf16>, vector<4x128xbf16>, vector<64x128xf32> -> vector<64x128xf32>
    %c0_104 = arith.constant 0 : index
    %c0_105 = arith.constant 0 : index
    %85 = vector.load %arg11[%c0_104, %c0_105] : memref<64x128xf32, #tpu.memory_space<vmem>>, vector<64x128xf32>
    %86 = arith.addf %85, %84 : vector<64x128xf32>
    %c0_106 = arith.constant 0 : index
    %c0_107 = arith.constant 0 : index
    %87 = vector.load %arg11[%c0_106, %c0_107] : memref<64x128xf32, #tpu.memory_space<vmem>>, vector<64x128xf32>
    tpu.vector_store %arg11[%c0_106, %c0_107], %86 {strides = array<i32>} : memref<64x128xf32, #tpu.memory_space<vmem>>, vector<64x128xf32>,
    %c0_108 = arith.constant 0 : index
    %c0_109 = arith.constant 0 : index
    %88 = vector.load %arg11[%c0_108, %c0_109] : memref<64x128xf32, #tpu.memory_space<vmem>>, vector<64x128xf32>
    %c0_110 = arith.constant 0 : index
    %c0_111 = arith.constant 0 : index
    %89 = vector.load %arg3[%c0_110, %c0_111] : memref<1x128xf32, #tpu.memory_space<vmem>>, vector<1x128xf32>
    %90 = vector.broadcast %89 : vector<1x128xf32> to vector<64x128xf32>
    %91 = arith.addf %88, %90 : vector<64x128xf32>
    %cst_112 = arith.constant 1.000000e-01 : f32
    %92 = vector.broadcast %cst_112 : f32 to vector<64x128xf32>
    %93 = arith.mulf %92, %91 : vector<64x128xf32>
    %94 = arith.maximumf %91, %93 : vector<64x128xf32>
    %95 = vector.extract_strided_slice %94 {offsets = [0, 0], sizes = [64, 8], strides = [1, 1]} : vector<64x128xf32> to vector<64x8xf32>
    %96 = arith.truncf %95 : vector<64x8xf32> to vector<64x8xbf16>
    %97 = vector.shape_cast %96 : vector<64x8xbf16> to vector<8x8x8xbf16>
    %c0_113 = arith.constant 0 : index
    %c0_114 = arith.constant 0 : index
    %c0_115 = arith.constant 0 : index
    %c0_116 = arith.constant 0 : index
    %98 = vector.load %arg10[%c0_113, %c0_114, %c0_115, %c0_116] : memref<1x8x8x8xbf16, #tpu.memory_space<vmem>>, vector<1x8x8x8xbf16>
    %99 = vector.shape_cast %98 : vector<1x8x8x8xbf16> to vector<8x8x8xbf16>
    %100 = vector.shape_cast %97 : vector<8x8x8xbf16> to vector<1x8x8x8xbf16>
    tpu.vector_store %arg10[%c0_113, %c0_114, %c0_115, %c0_116], %100 {strides = array<i32>} : memref<1x8x8x8xbf16, #tpu.memory_space<vmem>>, vector<1x8x8x8xbf16>,
    return
  }
  func.func @transform_0(%arg0: i32, %arg1: i32) -> (i32, i32, i32) {
    %c0_i32 = arith.constant 0 : i32
    %c0_i32_0 = arith.constant 0 : i32
    %c0_i32_1 = arith.constant 0 : i32
    %c0_i32_2 = arith.constant 0 : i32
    return %c0_i32, %c0_i32_0, %c0_i32_1 : i32, i32, i32
  }
  func.func @transform_1(%arg0: i32, %arg1: i32) -> (i32, i32) {
    %c0_i32 = arith.constant 0 : i32
    %c0_i32_0 = arith.constant 0 : i32
    %c0_i32_1 = arith.constant 0 : i32
    return %c0_i32, %c0_i32_0 : i32, i32
  }
  func.func @transform_2(%arg0: i32, %arg1: i32) -> (i32, i32, i32, i32) {
    %c0_i32 = arith.constant 0 : i32
    %c0_i32_0 = arith.constant 0 : i32
    %c0_i32_1 = arith.constant 0 : i32
    return %arg0, %arg1, %c0_i32, %c0_i32_0 : i32, i32, i32, i32
  }
  func.func @transform_3(%arg0: i32, %arg1: i32) -> (i32, i32, i32, i32) {
    %c1_i32 = arith.constant 1 : i32
    %0 = arith.addi %arg1, %c1_i32 : i32
    %c8_i32 = arith.constant 8 : i32
    %1 = arith.muli %c8_i32, %0 : i32
    %c0_i32 = arith.constant 0 : i32
    %c0_i32_0 = arith.constant 0 : i32
    %c0_i32_1 = arith.constant 0 : i32
    return %arg0, %1, %c0_i32, %c0_i32_0 : i32, i32, i32, i32
  }
  func.func @transform_4(%arg0: i32, %arg1: i32) -> (i32, i32, i32, i32) {
    %c0_i32 = arith.constant 0 : i32
    %c0_i32_0 = arith.constant 0 : i32
    %c0_i32_1 = arith.constant 0 : i32
    return %arg0, %arg1, %c0_i32, %c0_i32_0 : i32, i32, i32, i32
  }
  func.func @transform_5(%arg0: i32, %arg1: i32) -> (i32, i32, i32, i32) {
    %c1_i32 = arith.constant 1 : i32
    %0 = arith.addi %arg1, %c1_i32 : i32
    %c8_i32 = arith.constant 8 : i32
    %1 = arith.muli %c8_i32, %0 : i32
    %c0_i32 = arith.constant 0 : i32
    %c0_i32_0 = arith.constant 0 : i32
    %c0_i32_1 = arith.constant 0 : i32
    return %arg0, %1, %c0_i32, %c0_i32_0 : i32, i32, i32, i32
  }
  func.func @transform_6(%arg0: i32, %arg1: i32) -> (i32, i32, i32, i32) {
    %c0_i32 = arith.constant 0 : i32
    %c0_i32_0 = arith.constant 0 : i32
    %c0_i32_1 = arith.constant 0 : i32
    return %arg0, %arg1, %c0_i32, %c0_i32_0 : i32, i32, i32, i32
  }
  func.func @transform_7(%arg0: i32, %arg1: i32) -> (i32, i32, i32, i32) {
    %c0_i32 = arith.constant 0 : i32
    %c0_i32_0 = arith.constant 0 : i32
    %c0_i32_1 = arith.constant 0 : i32
    return %arg0, %arg1, %c0_i32, %c0_i32_0 : i32, i32, i32, i32
  }
  func.func @transform_8(%arg0: i32, %arg1: i32) -> (i32, i32, i32, i32) {
    %c0_i32 = arith.constant 0 : i32
    %c0_i32_0 = arith.constant 0 : i32
    %c0_i32_1 = arith.constant 0 : i32
    return %arg0, %arg1, %c0_i32, %c0_i32_0 : i32, i32, i32, i32
  }
}

</mosaic_0001>

<llo_original>
// kernel: downsampling_layer_apply.1
$region0: #{downsampling_layer_apply.1}
  #allocation0 [shape = 'u32[]', space=smem, size = 0x4, offset = 0x4, fixed_abs, tag = 'smem constant byte address 0x4 - core index']
  #allocation1 [shape = 'u32[144,128]{1,0:T(1,128)}', space=vmem, size = 0x12000, scoped, tag = 'internal scratch']
  #allocation2 [shape = 'f32[64,128]{1,0:T(8,128)}', space=vmem, size = 0x8000, scoped, tag = 'scratch operand']
  %s0 = inlined_call_operand.vmem [shape: bf16[9,4,128], index: 0, kind: input, shape index: {}]
  %s1 = inlined_call_operand.vmem [shape: f32[1,128], index: 1, kind: input, shape index: {}]
  %s2 = inlined_call_operand.vmem [shape: bf16[2,9,9,4], index: 2, kind: input, shape index: {}, may-alias: {2,3}]
  %s3 = inlined_call_operand.vmem [shape: bf16[2,9,9,4], index: 3, kind: input, shape index: {}, may-alias: {2,3}]
  %s4 = inlined_call_operand.vmem [shape: bf16[2,9,9,4], index: 4, kind: input, shape index: {}, may-alias: {4,5}]
  %s5 = inlined_call_operand.vmem [shape: bf16[2,9,9,4], index: 5, kind: input, shape index: {}, may-alias: {4,5}]
  %s6 = inlined_call_operand.vmem [shape: bf16[2,9,9,4], index: 6, kind: input, shape index: {}]
  %s7 = inlined_call_operand.vmem [shape: bf16[2,9,9,4], index: 7, kind: input, shape index: {}]
  %s8 = inlined_call_operand.vmem [shape: bf16[2,8,8,8], index: 8, kind: output, shape index: {}]
  %s9 = sld [smem:[#allocation0]]
  $region65: #{downsampling_layer_apply.1} parent=0
    _
  %s11 = ssub.s32 1, %s9
  %s12 = scalar_select 0, %s11, %s9
  loop: start=0, step=1, limit=4
  $region2: #{downsampling_layer_apply.1} parent=0 // loop_pre_header
    _
  $region3: #{downsampling_layer_apply.1} parent=0 // loop_header
    %s14 = sphi 0, %s18
    %p15 = scmp.ge.s32.totalorder %s14, 4
    %s21 = sphi 0, %s33
    %s22 = sphi 0, %s29
    %s23 = sphi 0, %s21
    %s24 = sphi 0, %s22
    %s25 = sphi 0, %s23
    %s26 = sphi 0, %s24
    %s34 = sphi 0, %s34
    %s36 = sphi 0, %s34
    %s37 = sphi 0, %s36
    %s51 = sphi 0, %s37
    %s55 = sphi 0, %s55
    %s57 = sphi 0, %s55
    %s58 = sphi 0, %s57
    %s72 = sphi 0, %s58
    %s80 = sphi 0, %s82
    %s83 = sphi 0, %s80
    %s84 = sphi 0, %s83
    %s100 = sphi 0, %s84
    %s112 = sphi 0, %s114
    %s115 = sphi 0, %s112
    %s116 = sphi 0, %s115
    %s132 = sphi 0, %s116
    %s140 = sphi 0, %s142
    %s143 = sphi 0, %s140
    %s144 = sphi 0, %s143
    %s160 = sphi 0, %s144
    %s172 = sphi 0, %s174
    %s175 = sphi 0, %s172
    %s176 = sphi 0, %s175
    %s192 = sphi 0, %s176
    %s200 = sphi 0, %s202
    %s203 = sphi 0, %s200
    %s204 = sphi 0, %s203
    %s220 = sphi 0, %s204
    %s228 = sphi 0, %s230
    %s231 = sphi 0, %s228
    %s232 = sphi 0, %s231
    %s248 = sphi 0, %s232
    %s256 = sphi 0, %s258
    %s259 = sphi 0, %s256
    %s260 = sphi 0, %s259
    %s276 = sphi 0, %s260
  $region4: #{downsampling_layer_apply.1} parent=0 // loop_header_branch
    %17 = sbr.rel (%p15) target = $region8
  $region5: #{downsampling_layer_apply.1} parent=0 // loop_body
    %s19 = ssub.s32 %s14, 1
    %s20 = ssub.s32 %s14, 2
    %s27 = sadd.s32 1, %s22
    %p28 = scmp.ge.s32.totalorder %s27, 1
    %s29 = scalar_select %p28, 0, %s27
    %s30 = sadd.s32 1, %s21
    %s31 = scalar_select %p28, %s30, %s21
    %p32 = scmp.ge.s32.totalorder %s31, 2
    %s33 = scalar_select %p32, 0, %s31
    %s35 = sadd.s32 %s34, 1
    %p38 = scmp.eq.s32.totalorder %s14, 1
    %p39 = scmp.ne.s32.totalorder %s34, %s36
    %p40 = scmp.eq.s32.totalorder %s14, 0
    %p41 = por %p39, %p40
    %p42 = scmp.ne.s32.totalorder %s34, %s36
    %p43 = scmp.eq.s32.totalorder %s19, 1
    %p44 = por %p42, %p43
    %p45 = scmp.ne.s32.totalorder %s36, %s37
    %p46 = scmp.eq.s32.totalorder %s19, 0
    %p47 = por %p45, %p46
    %p48 = scmp.ne.s32.totalorder %s36, %s37
    %p49 = scmp.eq.s32.totalorder %s20, 1
    %p50 = por %p48, %p49
    %p52 = scmp.ne.s32.totalorder %s37, %s51
    %p53 = scmp.eq.s32.totalorder %s20, 0
    %p54 = por %p52, %p53
    %s56 = sadd.s32 %s55, 1
    %p59 = scmp.eq.s32.totalorder %s14, 1
    %p60 = scmp.ne.s32.totalorder %s55, %s57
    %p61 = scmp.eq.s32.totalorder %s14, 0
    %p62 = por %p60, %p61
    %p63 = scmp.ne.s32.totalorder %s55, %s57
    %p64 = scmp.eq.s32.totalorder %s19, 1
    %p65 = por %p63, %p64
    %p66 = scmp.ne.s32.totalorder %s57, %s58
    %p67 = scmp.eq.s32.totalorder %s19, 0
    %p68 = por %p66, %p67
    %p69 = scmp.ne.s32.totalorder %s57, %s58
    %p70 = scmp.eq.s32.totalorder %s20, 1
    %p71 = por %p69, %p70
    %p73 = scmp.ne.s32.totalorder %s58, %s72
    %p74 = scmp.eq.s32.totalorder %s20, 0
    %p75 = por %p73, %p74
    %s76 = ssub.s32 %s21, %s33
    %s77 = ssub.s32 %s22, %s29
    %s78 = sor.u32 %s76, %s77
    %p79 = scmp.eq.s32.totalorder %s78, 0
    %s81 = sadd.s32 %s80, 1
    %s82 = scalar_select %p79, %s80, %s81
    %p85 = pneg %p79
    %p86 = scmp.eq.s32.totalorder %s14, 1
    %p87 = por %p85, %p86
    %p88 = scmp.ne.s32.totalorder %s80, %s83
    %p89 = scmp.eq.s32.totalorder %s14, 0
    %p90 = por %p88, %p89
    %p91 = scmp.ne.s32.totalorder %s80, %s83
    %p92 = scmp.eq.s32.totalorder %s19, 1
    %p93 = por %p91, %p92
    %p94 = scmp.ne.s32.totalorder %s83, %s84
    %p95 = scmp.eq.s32.totalorder %s19, 0
    %p96 = por %p94, %p95
    %p97 = scmp.ne.s32.totalorder %s83, %s84
    %p98 = scmp.eq.s32.totalorder %s20, 1
    %p99 = por %p97, %p98
    %p101 = scmp.ne.s32.totalorder %s84, %s100
    %p102 = scmp.eq.s32.totalorder %s20, 0
    %p103 = por %p101, %p102
    %s104 = sadd.s32 %s22, 1
    %s105 = smul.u32 %s104, 8
    %s106 = sadd.s32 %s29, 1
    %s107 = smul.u32 %s106, 8
    %s108 = ssub.s32 %s21, %s33
    %s109 = ssub.s32 %s105, %s107
    %s110 = sor.u32 %s108, %s109
    %p111 = scmp.eq.s32.totalorder %s110, 0
    %s113 = sadd.s32 %s112, 1
    %s114 = scalar_select %p111, %s112, %s113
    %p117 = pneg %p111
    %p118 = scmp.eq.s32.totalorder %s14, 1
    %p119 = por %p117, %p118
    %p120 = scmp.ne.s32.totalorder %s112, %s115
    %p121 = scmp.eq.s32.totalorder %s14, 0
    %p122 = por %p120, %p121
    %p123 = scmp.ne.s32.totalorder %s112, %s115
    %p124 = scmp.eq.s32.totalorder %s19, 1
    %p125 = por %p123, %p124
    %p126 = scmp.ne.s32.totalorder %s115, %s116
    %p127 = scmp.eq.s32.totalorder %s19, 0
    %p128 = por %p126, %p127
    %p129 = scmp.ne.s32.totalorder %s115, %s116
    %p130 = scmp.eq.s32.totalorder %s20, 1
    %p131 = por %p129, %p130
    %p133 = scmp.ne.s32.totalorder %s116, %s132
    %p134 = scmp.eq.s32.totalorder %s20, 0
    %p135 = por %p133, %p134
    %s136 = ssub.s32 %s21, %s33
    %s137 = ssub.s32 %s22, %s29
    %s138 = sor.u32 %s136, %s137
    %p139 = scmp.eq.s32.totalorder %s138, 0
    %s141 = sadd.s32 %s140, 1
    %s142 = scalar_select %p139, %s140, %s141
    %p145 = pneg %p139
    %p146 = scmp.eq.s32.totalorder %s14, 1
    %p147 = por %p145, %p146
    %p148 = scmp.ne.s32.totalorder %s140, %s143
    %p149 = scmp.eq.s32.totalorder %s14, 0
    %p150 = por %p148, %p149
    %p151 = scmp.ne.s32.totalorder %s140, %s143
    %p152 = scmp.eq.s32.totalorder %s19, 1
    %p153 = por %p151, %p152
    %p154 = scmp.ne.s32.totalorder %s143, %s144
    %p155 = scmp.eq.s32.totalorder %s19, 0
    %p156 = por %p154, %p155
    %p157 = scmp.ne.s32.totalorder %s143, %s144
    %p158 = scmp.eq.s32.totalorder %s20, 1
    %p159 = por %p157, %p158
    %p161 = scmp.ne.s32.totalorder %s144, %s160
    %p162 = scmp.eq.s32.totalorder %s20, 0
    %p163 = por %p161, %p162
    %s164 = sadd.s32 %s22, 1
    %s165 = smul.u32 %s164, 8
    %s166 = sadd.s32 %s29, 1
    %s167 = smul.u32 %s166, 8
    %s168 = ssub.s32 %s21, %s33
    %s169 = ssub.s32 %s165, %s167
    %s170 = sor.u32 %s168, %s169
    %p171 = scmp.eq.s32.totalorder %s170, 0
    %s173 = sadd.s32 %s172, 1
    %s174 = scalar_select %p171, %s172, %s173
    %p177 = pneg %p171
    %p178 = scmp.eq.s32.totalorder %s14, 1
    %p179 = por %p177, %p178
    %p180 = scmp.ne.s32.totalorder %s172, %s175
    %p181 = scmp.eq.s32.totalorder %s14, 0
    %p182 = por %p180, %p181
    %p183 = scmp.ne.s32.totalorder %s172, %s175
    %p184 = scmp.eq.s32.totalorder %s19, 1
    %p185 = por %p183, %p184
    %p186 = scmp.ne.s32.totalorder %s175, %s176
    %p187 = scmp.eq.s32.totalorder %s19, 0
    %p188 = por %p186, %p187
    %p189 = scmp.ne.s32.totalorder %s175, %s176
    %p190 = scmp.eq.s32.totalorder %s20, 1
    %p191 = por %p189, %p190
    %p193 = scmp.ne.s32.totalorder %s176, %s192
    %p194 = scmp.eq.s32.totalorder %s20, 0
    %p195 = por %p193, %p194
    %s196 = ssub.s32 %s21, %s33
    %s197 = ssub.s32 %s22, %s29
    %s198 = sor.u32 %s196, %s197
    %p199 = scmp.eq.s32.totalorder %s198, 0
    %s201 = sadd.s32 %s200, 1
    %s202 = scalar_select %p199, %s200, %s201
    %p205 = pneg %p199
    %p206 = scmp.eq.s32.totalorder %s14, 1
    %p207 = por %p205, %p206
    %p208 = scmp.ne.s32.totalorder %s200, %s203
    %p209 = scmp.eq.s32.totalorder %s14, 0
    %p210 = por %p208, %p209
    %p211 = scmp.ne.s32.totalorder %s200, %s203
    %p212 = scmp.eq.s32.totalorder %s19, 1
    %p213 = por %p211, %p212
    %p214 = scmp.ne.s32.totalorder %s203, %s204
    %p215 = scmp.eq.s32.totalorder %s19, 0
    %p216 = por %p214, %p215
    %p217 = scmp.ne.s32.totalorder %s203, %s204
    %p218 = scmp.eq.s32.totalorder %s20, 1
    %p219 = por %p217, %p218
    %p221 = scmp.ne.s32.totalorder %s204, %s220
    %p222 = scmp.eq.s32.totalorder %s20, 0
    %p223 = por %p221, %p222
    %s224 = ssub.s32 %s21, %s33
    %s225 = ssub.s32 %s22, %s29
    %s226 = sor.u32 %s224, %s225
    %p227 = scmp.eq.s32.totalorder %s226, 0
    %s229 = sadd.s32 %s228, 1
    %s230 = scalar_select %p227, %s228, %s229
    %p233 = pneg %p227
    %p234 = scmp.eq.s32.totalorder %s14, 1
    %p235 = por %p233, %p234
    %p236 = scmp.ne.s32.totalorder %s228, %s231
    %p237 = scmp.eq.s32.totalorder %s14, 0
    %p238 = por %p236, %p237
    %p239 = scmp.ne.s32.totalorder %s228, %s231
    %p240 = scmp.eq.s32.totalorder %s19, 1
    %p241 = por %p239, %p240
    %p242 = scmp.ne.s32.totalorder %s231, %s232
    %p243 = scmp.eq.s32.totalorder %s19, 0
    %p244 = por %p242, %p243
    %p245 = scmp.ne.s32.totalorder %s231, %s232
    %p246 = scmp.eq.s32.totalorder %s20, 1
    %p247 = por %p245, %p246
    %p249 = scmp.ne.s32.totalorder %s232, %s248
    %p250 = scmp.eq.s32.totalorder %s20, 0
    %p251 = por %p249, %p250
    %s252 = ssub.s32 %s21, %s33
    %s253 = ssub.s32 %s22, %s29
    %s254 = sor.u32 %s252, %s253
    %p255 = scmp.eq.s32.totalorder %s254, 0
    %s257 = sadd.s32 %s256, 1
    %s258 = scalar_select %p255, %s256, %s257
    %p261 = pneg %p255
    %p262 = scmp.eq.s32.totalorder %s14, 1
    %p263 = por %p261, %p262
    %p264 = scmp.ne.s32.totalorder %s256, %s259
    %p265 = scmp.eq.s32.totalorder %s14, 0
    %p266 = por %p264, %p265
    %p267 = scmp.ne.s32.totalorder %s256, %s259
    %p268 = scmp.eq.s32.totalorder %s19, 1
    %p269 = por %p267, %p268
    %p270 = scmp.ne.s32.totalorder %s259, %s260
    %p271 = scmp.eq.s32.totalorder %s19, 0
    %p272 = por %p270, %p271
    %p273 = scmp.ne.s32.totalorder %s259, %s260
    %p274 = scmp.eq.s32.totalorder %s20, 1
    %p275 = por %p273, %p274
    %p277 = scmp.ne.s32.totalorder %s260, %s276
    %p278 = scmp.eq.s32.totalorder %s20, 0
    %p279 = por %p277, %p278
    %p280 = scmp.le.s32.totalorder 1, %s14
    %p281 = scmp.lt.s32.totalorder %s14, 3
    %p282 = pnand %p280, %p281
    %p283 = pneg %p282
    // Predicated region
    $region9: #{downsampling_layer_apply.1} parent=5 // pred_check
      _
    $region10: #{downsampling_layer_apply.1} parent=5 // pred_check_branch
      %285 = sbr.rel (%p282) target = $region12
    $region11: #{downsampling_layer_apply.1} parent=5 // pred_region
      %s286 = ssub.s32 %s14, 1
      // Predicated region
      $region13: #{downsampling_layer_apply.1} parent=11 // pred_check
        %p287 = pneg %p47
      $region14: #{downsampling_layer_apply.1} parent=11 // pred_check_branch
        %289 = sbr.rel (%p287) target = $region16
      $region15: #{downsampling_layer_apply.1} parent=11 // pred_region
        _
      $region16: #{downsampling_layer_apply.1} parent=11 // pred_fallthru
        _
      // Predicated region
      $region17: #{downsampling_layer_apply.1} parent=11 // pred_check
        %p290 = pneg %p68
      $region18: #{downsampling_layer_apply.1} parent=11 // pred_check_branch
        %292 = sbr.rel (%p290) target = $region20
      $region19: #{downsampling_layer_apply.1} parent=11 // pred_region
        _
      $region20: #{downsampling_layer_apply.1} parent=11 // pred_fallthru
        _
    $region12: #{downsampling_layer_apply.1} parent=5 // pred_fallthru
      _
    %p293 = scmp.lt.s32.totalorder %s14, 2
    // Predicated region
    $region21: #{downsampling_layer_apply.1} parent=5 // pred_check
      %p294 = pneg %p293
    $region22: #{downsampling_layer_apply.1} parent=5 // pred_check_branch
      %296 = sbr.rel (%p294) target = $region24
    $region23: #{downsampling_layer_apply.1} parent=5 // pred_region
      // Predicated region
      $region25: #{downsampling_layer_apply.1} parent=23 // pred_check
        %p297 = pneg %p90
      $region26: #{downsampling_layer_apply.1} parent=23 // pred_check_branch
        %299 = sbr.rel (%p297) target = $region28
      $region27: #{downsampling_layer_apply.1} parent=23 // pred_region
        %s300 = smul.u32 8, %s22
        %s301 = ssub.s32 9, %s300
        %p302 = scmp.lt.s32.totalorder %s301, 8
        %s303 = scalar_select %p302, %s301, 8
        %s304 = smul.u32 64, %s303
        %s305 = smul.u32 %s304, 2
        %p306 = scmp.lt.s32.totalorder %s21, 1
        %s307 = scalar_select %p306, %s21, 1
        %p308 = scmp.lt.s32.totalorder %s300, 8
        %s309 = scalar_select %p308, %s300, 8
        %s310 = smul.addr %s309, 2
        %s311 = smul.addr %s307, 18
        %s312 = sadd.s32 %s310, %s311
        %s313 = smul.addr %s312, 4
        %s314 = scalar_lea.vmem %s2, %s313
        %s315 = smul.u32 8, %s22
        %s316 = ssub.s32 9, %s315
        %p317 = scmp.lt.s32.totalorder %s316, 8
        %s318 = scalar_select %p317, %s316, 8
        %s319 = smul.u32 64, %s318
        %s320 = smul.u32 %s319, 2
      $region28: #{downsampling_layer_apply.1} parent=23 // pred_fallthru
        _
      // Predicated region
      $region29: #{downsampling_layer_apply.1} parent=23 // pred_check
        %p321 = pneg %p122
      $region30: #{downsampling_layer_apply.1} parent=23 // pred_check_branch
        %323 = sbr.rel (%p321) target = $region32
      $region31: #{downsampling_layer_apply.1} parent=23 // pred_region
        %s324 = sadd.s32 %s22, 1
        %s325 = smul.u32 %s324, 8
        %p326 = scmp.lt.s32.totalorder %s21, 1
        %s327 = scalar_select %p326, %s21, 1
        %p328 = scmp.lt.s32.totalorder %s325, 8
        %s329 = scalar_select %p328, %s325, 8
        %s330 = smul.addr %s329, 2
        %s331 = smul.addr %s327, 18
        %s332 = sadd.s32 %s330, %s331
        %s333 = smul.addr %s332, 4
        %s334 = scalar_lea.vmem %s3, %s333
        %s335 = sadd.s32 %s22, 1
        %s336 = smul.u32 %s335, 8
      $region32: #{downsampling_layer_apply.1} parent=23 // pred_fallthru
        _
      // Predicated region
      $region33: #{downsampling_layer_apply.1} parent=23 // pred_check
        %p337 = pneg %p150
      $region34: #{downsampling_layer_apply.1} parent=23 // pred_check_branch
        %339 = sbr.rel (%p337) target = $region36
      $region35: #{downsampling_layer_apply.1} parent=23 // pred_region
        %s340 = smul.u32 8, %s22
        %s341 = ssub.s32 9, %s340
        %p342 = scmp.lt.s32.totalorder %s341, 8
        %s343 = scalar_select %p342, %s341, 8
        %s344 = smul.u32 64, %s343
        %s345 = smul.u32 %s344, 2
        %p346 = scmp.lt.s32.totalorder %s21, 1
        %s347 = scalar_select %p346, %s21, 1
        %p348 = scmp.lt.s32.totalorder %s340, 8
        %s349 = scalar_select %p348, %s340, 8
        %s350 = smul.addr %s349, 2
        %s351 = smul.addr %s347, 18
        %s352 = sadd.s32 %s350, %s351
        %s353 = smul.addr %s352, 4
        %s354 = scalar_lea.vmem %s4, %s353
        %s355 = smul.u32 8, %s22
        %s356 = ssub.s32 9, %s355
        %p357 = scmp.lt.s32.totalorder %s356, 8
        %s358 = scalar_select %p357, %s356, 8
        %s359 = smul.u32 64, %s358
        %s360 = smul.u32 %s359, 2
      $region36: #{downsampling_layer_apply.1} parent=23 // pred_fallthru
        _
      // Predicated region
      $region37: #{downsampling_layer_apply.1} parent=23 // pred_check
        %p361 = pneg %p182
      $region38: #{downsampling_layer_apply.1} parent=23 // pred_check_branch
        %363 = sbr.rel (%p361) target = $region40
      $region39: #{downsampling_layer_apply.1} parent=23 // pred_region
        %s364 = sadd.s32 %s22, 1
        %s365 = smul.u32 %s364, 8
        %p366 = scmp.lt.s32.totalorder %s21, 1
        %s367 = scalar_select %p366, %s21, 1
        %p368 = scmp.lt.s32.totalorder %s365, 8
        %s369 = scalar_select %p368, %s365, 8
        %s370 = smul.addr %s369, 2
        %s371 = smul.addr %s367, 18
        %s372 = sadd.s32 %s370, %s371
        %s373 = smul.addr %s372, 4
        %s374 = scalar_lea.vmem %s5, %s373
        %s375 = sadd.s32 %s22, 1
        %s376 = smul.u32 %s375, 8
      $region40: #{downsampling_layer_apply.1} parent=23 // pred_fallthru
        _
      // Predicated region
      $region41: #{downsampling_layer_apply.1} parent=23 // pred_check
        %p377 = pneg %p210
      $region42: #{downsampling_layer_apply.1} parent=23 // pred_check_branch
        %379 = sbr.rel (%p377) target = $region44
      $region43: #{downsampling_layer_apply.1} parent=23 // pred_region
        %s380 = smul.u32 8, %s22
        %s381 = ssub.s32 9, %s380
        %p382 = scmp.lt.s32.totalorder %s381, 8
        %s383 = scalar_select %p382, %s381, 8
        %s384 = smul.u32 64, %s383
        %s385 = smul.u32 %s384, 2
        %p386 = scmp.lt.s32.totalorder %s21, 1
        %s387 = scalar_select %p386, %s21, 1
        %p388 = scmp.lt.s32.totalorder %s380, 8
        %s389 = scalar_select %p388, %s380, 8
        %s390 = smul.addr %s389, 2
        %s391 = smul.addr %s387, 18
        %s392 = sadd.s32 %s390, %s391
        %s393 = smul.addr %s392, 4
        %s394 = scalar_lea.vmem %s6, %s393
        %s395 = smul.u32 8, %s22
        %s396 = ssub.s32 9, %s395
        %p397 = scmp.lt.s32.totalorder %s396, 8
        %s398 = scalar_select %p397, %s396, 8
        %s399 = smul.u32 64, %s398
        %s400 = smul.u32 %s399, 2
      $region44: #{downsampling_layer_apply.1} parent=23 // pred_fallthru
        _
      // Predicated region
      $region45: #{downsampling_layer_apply.1} parent=23 // pred_check
        %p401 = pneg %p238
      $region46: #{downsampling_layer_apply.1} parent=23 // pred_check_branch
        %403 = sbr.rel (%p401) target = $region48
      $region47: #{downsampling_layer_apply.1} parent=23 // pred_region
        %s404 = smul.u32 8, %s22
        %s405 = ssub.s32 9, %s404
        %p406 = scmp.lt.s32.totalorder %s405, 8
        %s407 = scalar_select %p406, %s405, 8
        %s408 = smul.u32 64, %s407
        %s409 = smul.u32 %s408, 2
        %p410 = scmp.lt.s32.totalorder %s21, 1
        %s411 = scalar_select %p410, %s21, 1
        %p412 = scmp.lt.s32.totalorder %s404, 8
        %s413 = scalar_select %p412, %s404, 8
        %s414 = smul.addr %s413, 2
        %s415 = smul.addr %s411, 18
        %s416 = sadd.s32 %s414, %s415
        %s417 = smul.addr %s416, 4
        %s418 = scalar_lea.vmem %s7, %s417
        %s419 = smul.u32 8, %s22
        %s420 = ssub.s32 9, %s419
        %p421 = scmp.lt.s32.totalorder %s420, 8
        %s422 = scalar_select %p421, %s420, 8
        %s423 = smul.u32 64, %s422
        %s424 = smul.u32 %s423, 2
      $region48: #{downsampling_layer_apply.1} parent=23 // pred_fallthru
        _
    $region24: #{downsampling_layer_apply.1} parent=5 // pred_fallthru
      _
    %p425 = scmp.le.s32.totalorder 1, %s14
    %p426 = scmp.lt.s32.totalorder %s14, 3
    %p427 = pnand %p425, %p426
    %p428 = pneg %p427
    // Predicated region
    $region49: #{downsampling_layer_apply.1} parent=5 // pred_check
      _
    $region50: #{downsampling_layer_apply.1} parent=5 // pred_check_branch
      %430 = sbr.rel (%p427) target = $region52
    $region51: #{downsampling_layer_apply.1} parent=5 // pred_region
      %s431 = ssub.s32 %s14, 1
      %p432 = pneg %p47
      %p433 = pneg %p44
      %p434 = pneg %p68
      %p435 = pneg %p65
      %s436 = smul.u32 8, %s24
      %s437 = ssub.s32 9, %s436
      %p438 = scmp.lt.s32.totalorder %s437, 8
      %s439 = scalar_select %p438, %s437, 8
      %s440 = smul.u32 64, %s439
      %s441 = smul.u32 %s440, 2
      %p442 = scmp.lt.s32.totalorder %s23, 1
      %s443 = scalar_select %p442, %s23, 1
      %p444 = scmp.lt.s32.totalorder %s436, 8
      %s445 = scalar_select %p444, %s436, 8
      %s446 = smul.addr %s445, 2
      %s447 = smul.addr %s443, 18
      %s448 = sadd.s32 %s446, %s447
      %s449 = smul.addr %s448, 4
      %s450 = scalar_lea.vmem %s2, %s449
      %p451 = pneg %p96
      %p452 = pneg %p93
      %s453 = sadd.s32 %s24, 1
      %s454 = smul.u32 %s453, 8
      %p455 = scmp.lt.s32.totalorder %s23, 1
      %s456 = scalar_select %p455, %s23, 1
      %p457 = scmp.lt.s32.totalorder %s454, 8
      %s458 = scalar_select %p457, %s454, 8
      %s459 = smul.addr %s458, 2
      %s460 = smul.addr %s456, 18
      %s461 = sadd.s32 %s459, %s460
      %s462 = smul.addr %s461, 4
      %s463 = scalar_lea.vmem %s3, %s462
      %p464 = pneg %p128
      %p465 = pneg %p125
      %s466 = smul.u32 8, %s24
      %s467 = ssub.s32 9, %s466
      %p468 = scmp.lt.s32.totalorder %s467, 8
      %s469 = scalar_select %p468, %s467, 8
      %s470 = smul.u32 64, %s469
      %s471 = smul.u32 %s470, 2
      %p472 = scmp.lt.s32.totalorder %s23, 1
      %s473 = scalar_select %p472, %s23, 1
      %p474 = scmp.lt.s32.totalorder %s466, 8
      %s475 = scalar_select %p474, %s466, 8
      %s476 = smul.addr %s475, 2
      %s477 = smul.addr %s473, 18
      %s478 = sadd.s32 %s476, %s477
      %s479 = smul.addr %s478, 4
      %s480 = scalar_lea.vmem %s4, %s479
      %p481 = pneg %p156
      %p482 = pneg %p153
      %s483 = sadd.s32 %s24, 1
      %s484 = smul.u32 %s483, 8
      %p485 = scmp.lt.s32.totalorder %s23, 1
      %s486 = scalar_select %p485, %s23, 1
      %p487 = scmp.lt.s32.totalorder %s484, 8
      %s488 = scalar_select %p487, %s484, 8
      %s489 = smul.addr %s488, 2
      %s490 = smul.addr %s486, 18
      %s491 = sadd.s32 %s489, %s490
      %s492 = smul.addr %s491, 4
      %s493 = scalar_lea.vmem %s5, %s492
      %p494 = pneg %p188
      %p495 = pneg %p185
      %s496 = smul.u32 8, %s24
      %s497 = ssub.s32 9, %s496
      %p498 = scmp.lt.s32.totalorder %s497, 8
      %s499 = scalar_select %p498, %s497, 8
      %s500 = smul.u32 64, %s499
      %s501 = smul.u32 %s500, 2
      %p502 = scmp.lt.s32.totalorder %s23, 1
      %s503 = scalar_select %p502, %s23, 1
      %p504 = scmp.lt.s32.totalorder %s496, 8
      %s505 = scalar_select %p504, %s496, 8
      %s506 = smul.addr %s505, 2
      %s507 = smul.addr %s503, 18
      %s508 = sadd.s32 %s506, %s507
      %s509 = smul.addr %s508, 4
      %s510 = scalar_lea.vmem %s6, %s509
      %p511 = pneg %p216
      %p512 = pneg %p213
      %s513 = smul.u32 8, %s24
      %s514 = ssub.s32 9, %s513
      %p515 = scmp.lt.s32.totalorder %s514, 8
      %s516 = scalar_select %p515, %s514, 8
      %s517 = smul.u32 64, %s516
      %s518 = smul.u32 %s517, 2
      %p519 = scmp.lt.s32.totalorder %s23, 1
      %s520 = scalar_select %p519, %s23, 1
      %p521 = scmp.lt.s32.totalorder %s513, 8
      %s522 = scalar_select %p521, %s513, 8
      %s523 = smul.addr %s522, 2
      %s524 = smul.addr %s520, 18
      %s525 = sadd.s32 %s523, %s524
      %s526 = smul.addr %s525, 4
      %s527 = scalar_lea.vmem %s7, %s526
      %p528 = pneg %p244
      %p529 = pneg %p241
      %p530 = pneg %p272
      %p531 = pneg %p269
      %s532 = smul.u32 8, %s24
      %p533 = scmp.lt.s32.totalorder %s23, 1
      %s534 = scalar_select %p533, %s23, 1
      %p535 = scmp.lt.s32.totalorder %s532, 7
      %s536 = scalar_select %p535, %s532, 7
      %s537 = smul.addr %s534, 8
      %s538 = sadd.s32 %s536, %s537
      %s539 = smul.addr %s538, 4
      %s540 = scalar_lea.vmem %s8, %s539
      %s541 = smul.u32 8, %s24
      %s542 = ssub.s32 9, %s541
      %p543 = scmp.lt.s32.totalorder %s542, 8
      %s544 = scalar_select %p543, %s542, 8
      %s545 = smul.u32 64, %s544
      %s546 = smul.u32 %s545, 2
      %p547 = scmp.lt.s32.totalorder %s23, 1
      %s548 = scalar_select %p547, %s23, 1
      %p549 = scmp.lt.s32.totalorder %s541, 8
      %s550 = scalar_select %p549, %s541, 8
      %s551 = smul.addr %s550, 2
      %s552 = smul.addr %s548, 18
      %s553 = sadd.s32 %s551, %s552
      %s554 = smul.addr %s553, 4
      %s555 = scalar_lea.vmem %s2, %s554
      %s556 = smul.u32 8, %s24
      %s557 = ssub.s32 9, %s556
      %p558 = scmp.lt.s32.totalorder %s557, 8
      %s559 = scalar_select %p558, %s557, 8
      %s560 = smul.u32 64, %s559
      %s561 = smul.u32 %s560, 2
      %s562 = sadd.s32 %s24, 1
      %s563 = smul.u32 %s562, 8
      %p564 = scmp.lt.s32.totalorder %s23, 1
      %s565 = scalar_select %p564, %s23, 1
      %p566 = scmp.lt.s32.totalorder %s563, 8
      %s567 = scalar_select %p566, %s563, 8
      %s568 = smul.addr %s567, 2
      %s569 = smul.addr %s565, 18
      %s570 = sadd.s32 %s568, %s569
      %s571 = smul.addr %s570, 4
      %s572 = scalar_lea.vmem %s3, %s571
      %s573 = sadd.s32 %s24, 1
      %s574 = smul.u32 %s573, 8
      %s575 = smul.u32 8, %s24
      %s576 = ssub.s32 9, %s575
      %p577 = scmp.lt.s32.totalorder %s576, 8
      %s578 = scalar_select %p577, %s576, 8
      %s579 = smul.u32 64, %s578
      %s580 = smul.u32 %s579, 2
      %p581 = scmp.lt.s32.totalorder %s23, 1
      %s582 = scalar_select %p581, %s23, 1
      %p583 = scmp.lt.s32.totalorder %s575, 8
      %s584 = scalar_select %p583, %s575, 8
      %s585 = smul.addr %s584, 2
      %s586 = smul.addr %s582, 18
      %s587 = sadd.s32 %s585, %s586
      %s588 = smul.addr %s587, 4
      %s589 = scalar_lea.vmem %s4, %s588
      %s590 = smul.u32 8, %s24
      %s591 = ssub.s32 9, %s590
      %p592 = scmp.lt.s32.totalorder %s591, 8
      %s593 = scalar_select %p592, %s591, 8
      %s594 = smul.u32 64, %s593
      %s595 = smul.u32 %s594, 2
      %s596 = sadd.s32 %s24, 1
      %s597 = smul.u32 %s596, 8
      %p598 = scmp.lt.s32.totalorder %s23, 1
      %s599 = scalar_select %p598, %s23, 1
      %p600 = scmp.lt.s32.totalorder %s597, 8
      %s601 = scalar_select %p600, %s597, 8
      %s602 = smul.addr %s601, 2
      %s603 = smul.addr %s599, 18
      %s604 = sadd.s32 %s602, %s603
      %s605 = smul.addr %s604, 4
      %s606 = scalar_lea.vmem %s5, %s605
      %s607 = sadd.s32 %s24, 1
      %s608 = smul.u32 %s607, 8
      %s609 = smul.u32 8, %s24
      %s610 = ssub.s32 9, %s609
      %p611 = scmp.lt.s32.totalorder %s610, 8
      %s612 = scalar_select %p611, %s610, 8
      %s613 = smul.u32 64, %s612
      %s614 = smul.u32 %s613, 2
      %p615 = scmp.lt.s32.totalorder %s23, 1
      %s616 = scalar_select %p615, %s23, 1
      %p617 = scmp.lt.s32.totalorder %s609, 8
      %s618 = scalar_select %p617, %s609, 8
      %s619 = smul.addr %s618, 2
      %s620 = smul.addr %s616, 18
      %s621 = sadd.s32 %s619, %s620
      %s622 = smul.addr %s621, 4
      %s623 = scalar_lea.vmem %s6, %s622
      %s624 = smul.u32 8, %s24
      %s625 = ssub.s32 9, %s624
      %p626 = scmp.lt.s32.totalorder %s625, 8
      %s627 = scalar_select %p626, %s625, 8
      %s628 = smul.u32 64, %s627
      %s629 = smul.u32 %s628, 2
      %s630 = smul.u32 8, %s24
      %s631 = ssub.s32 9, %s630
      %p632 = scmp.lt.s32.totalorder %s631, 8
      %s633 = scalar_select %p632, %s631, 8
      %s634 = smul.u32 64, %s633
      %s635 = smul.u32 %s634, 2
      %p636 = scmp.lt.s32.totalorder %s23, 1
      %s637 = scalar_select %p636, %s23, 1
      %p638 = scmp.lt.s32.totalorder %s630, 8
      %s639 = scalar_select %p638, %s630, 8
      %s640 = smul.addr %s639, 2
      %s641 = smul.addr %s637, 18
      %s642 = sadd.s32 %s640, %s641
      %s643 = smul.addr %s642, 4
      %s644 = scalar_lea.vmem %s7, %s643
      %s645 = smul.u32 8, %s24
      %s646 = ssub.s32 9, %s645
      %p647 = scmp.lt.s32.totalorder %s646, 8
      %s648 = scalar_select %p647, %s646, 8
      %s649 = smul.u32 64, %s648
      %s650 = smul.u32 %s649, 2
      %s651 = smul.u32 8, %s24
      %p652 = scmp.lt.s32.totalorder %s23, 1
      %s653 = scalar_select %p652, %s23, 1
      %p654 = scmp.lt.s32.totalorder %s651, 7
      %s655 = scalar_select %p654, %s651, 7
      %s656 = smul.addr %s653, 8
      %s657 = sadd.s32 %s655, %s656
      %s658 = smul.addr %s657, 4
      %s659 = scalar_lea.vmem %s8, %s658
      %s660 = smul.u32 8, %s24
      %v662 = vld [vmem:[%s555] sm:$0xf]
      %v663 = vld [vmem:[%s555 + $0x8] sm:$0xf]
      %v664 = vld [vmem:[%s555 + $0x10] sm:$0xf]
      %v665 = vld [vmem:[%s555 + $0x18] sm:$0xf]
      %v666 = vld [vmem:[%s555 + $0x20] sm:$0xf]
      %v667 = vld [vmem:[%s555 + $0x28] sm:$0xf]
      %v668 = vld [vmem:[%s555 + $0x30] sm:$0xf]
      %v669 = vld [vmem:[%s555 + $0x38] sm:$0xf]
      %v670 = vld [vmem:[%s0] sm:$0x3]
      %v679 = vunpack.c.l.b16 %v662
      %v680 = vunpack.c.l.b16 %v663
      %v681 = vunpack.c.l.b16 %v664
      %v682 = vunpack.c.l.b16 %v665
      %v683 = vunpack.c.l.b16 %v666
      %v684 = vunpack.c.l.b16 %v667
      %v685 = vunpack.c.l.b16 %v668
      %v686 = vunpack.c.l.b16 %v669
      %v687 = vpack.c.b16 %v680, %v679
      %v688 = vpack.c.b16 %v682, %v681
      %v689 = vpack.c.b16 %v684, %v683
      %v690 = vpack.c.b16 %v686, %v685
      %vm691 = vcmask 31744
      %v693 = vsel %vm691, %v687, 0
      %v696 = vsel %vm691, %v688, 0
      %v699 = vsel %vm691, %v689, 0
      %v702 = vsel %vm691, %v690, 0
      %vm704 = vcmask 1041408
      %v706 = vsel %vm704, %v670, 0
      %708 = vmatprep.subr.bf16.mxu0 0
      %709 = vmatpush1.bf16.msra.mxu0 %v706
      %710 = vmatprep.subr.bf16.mxu0 0
      %711 = vmatpush1.bf16.msra.mxu0 0
      %712 = vmatprep.subr.bf16.mxu0 0
      %713 = vmatpush1.bf16.msra.mxu0 0
      %714 = vmatprep.subr.bf16.mxu0 0
      %715 = vmatpush1.bf16.msra.mxu0 0
      %716 = vmatprep.subr.bf16.mxu0 0
      %717 = vmatpush1.bf16.msra.mxu0 0
      %718 = vmatprep.subr.bf16.mxu0 0
      %719 = vmatpush1.bf16.msra.mxu0 0
      %720 = vmatprep.subr.bf16.mxu0 0
      %721 = vmatpush1.bf16.msra.mxu0 0
      %722 = vmatprep.subr.bf16.mxu0 0
      %723 = vmatpush1.bf16.msra.mxu0 0
      %724 = vmatprep.subr.bf16.mxu0 0
      %725 = vmatpush1.bf16.msra.mxu0 0
      %726 = vmatprep.subr.bf16.mxu0 0
      %727 = vmatpush1.bf16.msra.mxu0 0
      %728 = vmatprep.subr.bf16.mxu0 0
      %729 = vmatpush1.bf16.msra.mxu0 0
      %730 = vmatprep.subr.bf16.mxu0 0
      %731 = vmatpush1.bf16.msra.mxu0 0
      %732 = vmatprep.subr.bf16.mxu0 0
      %733 = vmatpush1.bf16.msra.mxu0 0
      %734 = vmatprep.subr.bf16.mxu0 0
      %735 = vmatpush1.bf16.msra.mxu0 0
      %736 = vmatprep.subr.bf16.mxu0 0
      %737 = vmatpush1.bf16.msra.mxu0 0
      %738 = vmatprep.subr.bf16.mxu0 0
      %739 = vmatpush1.bf16.msra.mxu0 0
      %740 = vmatprep.mubr.bf16.mxu0 0
      %741 = vmatmul.mubr.bf16.gmra.mrb[0].mxu0 %v693
      %v742 = vpop.f32.mrb[0].mxu0
      %v743 = vadd.f32 0.0, %v742
      %v744 = vpop.f32.mrb[0].mxu0
      %v745 = vpop.f32.mrb[0].mxu0
      %v746 = vadd.f32 0.0, %v745
      %v747 = vpop.f32.mrb[0].mxu0
      %748 = vmatprep.mubr.bf16.mxu0 0
      %749 = vmatmul.mubr.bf16.gmra.mrb[0].mxu0 %v696
      %v750 = vpop.f32.mrb[0].mxu0
      %v751 = vadd.f32 0.0, %v750
      %v752 = vpop.f32.mrb[0].mxu0
      %v753 = vpop.f32.mrb[0].mxu0
      %v754 = vadd.f32 0.0, %v753
      %v755 = vpop.f32.mrb[0].mxu0
      %756 = vmatprep.mubr.bf16.mxu0 0
      %757 = vmatmul.mubr.bf16.gmra.mrb[0].mxu0 %v699
      %v758 = vpop.f32.mrb[0].mxu0
      %v759 = vadd.f32 0.0, %v758
      %v760 = vpop.f32.mrb[0].mxu0
      %v761 = vpop.f32.mrb[0].mxu0
      %v762 = vadd.f32 0.0, %v761
      %v763 = vpop.f32.mrb[0].mxu0
      %764 = vmatprep.mubr.bf16.mxu0 0
      %765 = vmatmul.mubr.bf16.gmra.mrb[0].mxu0 %v702
      %v766 = vpop.f32.mrb[0].mxu0
      %v767 = vadd.f32 0.0, %v766
      %v768 = vpop.f32.mrb[0].mxu0
      %v769 = vpop.f32.mrb[0].mxu0
      %v770 = vadd.f32 0.0, %v769
      %v771 = vpop.f32.mrb[0].mxu0
      %772 = vdwg.mxu0
      %773 = vst [vmem:[#allocation2] sm:$0xff] %v743
      %774 = vst [vmem:[#allocation2 + $0x8] sm:$0xff] %v746
      %775 = vst [vmem:[#allocation2 + $0x10] sm:$0xff] %v751
      %776 = vst [vmem:[#allocation2 + $0x18] sm:$0xff] %v754
      %777 = vst [vmem:[#allocation2 + $0x20] sm:$0xff] %v759
      %778 = vst [vmem:[#allocation2 + $0x28] sm:$0xff] %v762
      %779 = vst [vmem:[#allocation2 + $0x30] sm:$0xff] %v767
      %780 = vst [vmem:[#allocation2 + $0x38] sm:$0xff] %v770
      %v781 = vld [vmem:[%s589] sm:$0xf]
      %v782 = vld [vmem:[%s589 + $0x8] sm:$0xf]
      %v783 = vld [vmem:[%s589 + $0x10] sm:$0xf]
      %v784 = vld [vmem:[%s589 + $0x18] sm:$0xf]
      %v785 = vld [vmem:[%s589 + $0x20] sm:$0xf]
      %v786 = vld [vmem:[%s589 + $0x28] sm:$0xf]
      %v787 = vld [vmem:[%s589 + $0x30] sm:$0xf]
      %v788 = vld [vmem:[%s589 + $0x38] sm:$0xf]
      %s789 = scalar_lea.vmem %s0, 2
      %v790 = vld [vmem:[%s789] sm:$0x3]
      %v799 = vunpack.c.l.b16 %v781
      %v800 = vunpack.c.l.b16 %v782
      %v801 = vunpack.c.l.b16 %v783
      %v802 = vunpack.c.l.b16 %v784
      %v803 = vunpack.c.l.b16 %v785
      %v804 = vunpack.c.l.b16 %v786
      %v805 = vunpack.c.l.b16 %v787
      %v806 = vunpack.c.l.b16 %v788
      %v807 = vpack.c.b16 %v800, %v799
      %v808 = vpack.c.b16 %v802, %v801
      %v809 = vpack.c.b16 %v804, %v803
      %v810 = vpack.c.b16 %v806, %v805
      %v812 = vsel %vm691, %v807, 0
      %v815 = vsel %vm691, %v808, 0
      %v818 = vsel %vm691, %v809, 0
      %v821 = vsel %vm691, %v810, 0
      %v824 = vsel %vm704, %v790, 0
      %826 = vmatprep.subr.bf16.mxu0 0
      %827 = vmatpush1.bf16.msra.mxu0 %v824
      %828 = vmatprep.subr.bf16.mxu0 0
      %829 = vmatpush1.bf16.msra.mxu0 0
      %830 = vmatprep.subr.bf16.mxu0 0
      %831 = vmatpush1.bf16.msra.mxu0 0
      %832 = vmatprep.subr.bf16.mxu0 0
      %833 = vmatpush1.bf16.msra.mxu0 0
      %834 = vmatprep.subr.bf16.mxu0 0
      %835 = vmatpush1.bf16.msra.mxu0 0
      %836 = vmatprep.subr.bf16.mxu0 0
      %837 = vmatpush1.bf16.msra.mxu0 0
      %838 = vmatprep.subr.bf16.mxu0 0
      %839 = vmatpush1.bf16.msra.mxu0 0
      %840 = vmatprep.subr.bf16.mxu0 0
      %841 = vmatpush1.bf16.msra.mxu0 0
      %842 = vmatprep.subr.bf16.mxu0 0
      %843 = vmatpush1.bf16.msra.mxu0 0
      %844 = vmatprep.subr.bf16.mxu0 0
      %845 = vmatpush1.bf16.msra.mxu0 0
      %846 = vmatprep.subr.bf16.mxu0 0
      %847 = vmatpush1.bf16.msra.mxu0 0
      %848 = vmatprep.subr.bf16.mxu0 0
      %849 = vmatpush1.bf16.msra.mxu0 0
      %850 = vmatprep.subr.bf16.mxu0 0
      %851 = vmatpush1.bf16.msra.mxu0 0
      %852 = vmatprep.subr.bf16.mxu0 0
      %853 = vmatpush1.bf16.msra.mxu0 0
      %854 = vmatprep.subr.bf16.mxu0 0
      %855 = vmatpush1.bf16.msra.mxu0 0
      %856 = vmatprep.subr.bf16.mxu0 0
      %857 = vmatpush1.bf16.msra.mxu0 0
      %858 = vmatprep.mubr.bf16.mxu0 0
      %859 = vmatmul.mubr.bf16.gmra.mrb[0].mxu0 %v812
      %v860 = vpop.f32.mrb[0].mxu0
      %v861 = vadd.f32 0.0, %v860
      %v862 = vpop.f32.mrb[0].mxu0
      %v863 = vpop.f32.mrb[0].mxu0
      %v864 = vadd.f32 0.0, %v863
      %v865 = vpop.f32.mrb[0].mxu0
      %866 = vmatprep.mubr.bf16.mxu0 0
      %867 = vmatmul.mubr.bf16.gmra.mrb[0].mxu0 %v815
      %v868 = vpop.f32.mrb[0].mxu0
      %v869 = vadd.f32 0.0, %v868
      %v870 = vpop.f32.mrb[0].mxu0
      %v871 = vpop.f32.mrb[0].mxu0
      %v872 = vadd.f32 0.0, %v871
      %v873 = vpop.f32.mrb[0].mxu0
      %874 = vmatprep.mubr.bf16.mxu0 0
      %875 = vmatmul.mubr.bf16.gmra.mrb[0].mxu0 %v818
      %v876 = vpop.f32.mrb[0].mxu0
      %v877 = vadd.f32 0.0, %v876
      %v878 = vpop.f32.mrb[0].mxu0
      %v879 = vpop.f32.mrb[0].mxu0
      %v880 = vadd.f32 0.0, %v879
      %v881 = vpop.f32.mrb[0].mxu0
      %882 = vmatprep.mubr.bf16.mxu0 0
      %883 = vmatmul.mubr.bf16.gmra.mrb[0].mxu0 %v821
      %v884 = vpop.f32.mrb[0].mxu0
      %v885 = vadd.f32 0.0, %v884
      %v886 = vpop.f32.mrb[0].mxu0
      %v887 = vpop.f32.mrb[0].mxu0
      %v888 = vadd.f32 0.0, %v887
      %v889 = vpop.f32.mrb[0].mxu0
      %890 = vdwg.mxu0
      %v891 = vld [vmem:[#allocation2] sm:$0xff]
      %v892 = vld [vmem:[#allocation2 + $0x8] sm:$0xff]
      %v893 = vld [vmem:[#allocation2 + $0x10] sm:$0xff]
      %v894 = vld [vmem:[#allocation2 + $0x18] sm:$0xff]
      %v895 = vld [vmem:[#allocation2 + $0x20] sm:$0xff]
      %v896 = vld [vmem:[#allocation2 + $0x28] sm:$0xff]
      %v897 = vld [vmem:[#allocation2 + $0x30] sm:$0xff]
      %v898 = vld [vmem:[#allocation2 + $0x38] sm:$0xff]
      %v899 = vadd.f32 %v891, %v861
      %v900 = vadd.f32 %v892, %v864
      %v901 = vadd.f32 %v893, %v869
      %v902 = vadd.f32 %v894, %v872
      %v903 = vadd.f32 %v895, %v877
      %v904 = vadd.f32 %v896, %v880
      %v905 = vadd.f32 %v897, %v885
      %v906 = vadd.f32 %v898, %v888
      %907 = vst [vmem:[#allocation2] sm:$0xff] %v899
      %908 = vst [vmem:[#allocation2 + $0x8] sm:$0xff] %v900
      %909 = vst [vmem:[#allocation2 + $0x10] sm:$0xff] %v901
      %910 = vst [vmem:[#allocation2 + $0x18] sm:$0xff] %v902
      %911 = vst [vmem:[#allocation2 + $0x20] sm:$0xff] %v903
      %912 = vst [vmem:[#allocation2 + $0x28] sm:$0xff] %v904
      %913 = vst [vmem:[#allocation2 + $0x30] sm:$0xff] %v905
      %914 = vst [vmem:[#allocation2 + $0x38] sm:$0xff] %v906
      %v915 = vld [vmem:[%s555] sm:$0xf]
      %v916 = vld [vmem:[%s555 + $0x4] sm:$0x1]
      %v917 = vld [vmem:[%s555 + $0x8] sm:$0xf]
      %v918 = vld [vmem:[%s555 + $0xc] sm:$0x1]
      %v919 = vld [vmem:[%s555 + $0x10] sm:$0xf]
      %v920 = vld [vmem:[%s555 + $0x14] sm:$0x1]
      %v921 = vld [vmem:[%s555 + $0x18] sm:$0xf]
      %v922 = vld [vmem:[%s555 + $0x1c] sm:$0x1]
      %v923 = vld [vmem:[%s555 + $0x20] sm:$0xf]
      %v924 = vld [vmem:[%s555 + $0x24] sm:$0x1]
      %v925 = vld [vmem:[%s555 + $0x28] sm:$0xf]
      %v926 = vld [vmem:[%s555 + $0x2c] sm:$0x1]
      %v927 = vld [vmem:[%s555 + $0x30] sm:$0xf]
      %v928 = vld [vmem:[%s555 + $0x34] sm:$0x1]
      %v929 = vld [vmem:[%s555 + $0x38] sm:$0xf]
      %v930 = vld [vmem:[%s555 + $0x3c] sm:$0x1]
      %vm931 = vsmask.f32 3328
      %vm932 = vsmask.f32 7440
      %vm933 = vmor %vm931, %vm932
      %v935 = vshrl.u32 %v915, 16
      %v937 = vrot.slane %v935, 4
      %v938 = vshll.u32 %v915, 16
      %v940 = vrot.slane %v938, 5
      %v941 = vor.u32 %v937, %v940
      %v942 = vrot.slane %v941, 4
      %v944 = vshll.u32 %v916, 16
      %v946 = vrot.slane %v944, 5
      %v947 = vsel %vm933, %v942, %v946
      %v949 = vshrl.u32 %v917, 16
      %v951 = vrot.slane %v949, 4
      %v952 = vshll.u32 %v917, 16
      %v954 = vrot.slane %v952, 5
      %v955 = vor.u32 %v951, %v954
      %v956 = vrot.slane %v955, 4
      %v958 = vshll.u32 %v918, 16
      %v960 = vrot.slane %v958, 5
      %v961 = vsel %vm933, %v956, %v960
      %v963 = vshrl.u32 %v919, 16
      %v965 = vrot.slane %v963, 4
      %v966 = vshll.u32 %v919, 16
      %v968 = vrot.slane %v966, 5
      %v969 = vor.u32 %v965, %v968
      %v970 = vrot.slane %v969, 4
      %v972 = vshll.u32 %v920, 16
      %v974 = vrot.slane %v972, 5
      %v975 = vsel %vm933, %v970, %v974
      %v977 = vshrl.u32 %v921, 16
      %v979 = vrot.slane %v977, 4
      %v980 = vshll.u32 %v921, 16
      %v982 = vrot.slane %v980, 5
      %v983 = vor.u32 %v979, %v982
      %v984 = vrot.slane %v983, 4
      %v986 = vshll.u32 %v922, 16
      %v988 = vrot.slane %v986, 5
      %v989 = vsel %vm933, %v984, %v988
      %v991 = vshrl.u32 %v923, 16
      %v993 = vrot.slane %v991, 4
      %v994 = vshll.u32 %v923, 16
      %v996 = vrot.slane %v994, 5
      %v997 = vor.u32 %v993, %v996
      %v998 = vrot.slane %v997, 4
      %v1000 = vshll.u32 %v924, 16
      %v1002 = vrot.slane %v1000, 5
      %v1003 = vsel %vm933, %v998, %v1002
      %v1005 = vshrl.u32 %v925, 16
      %v1007 = vrot.slane %v1005, 4
      %v1008 = vshll.u32 %v925, 16
      %v1010 = vrot.slane %v1008, 5
      %v1011 = vor.u32 %v1007, %v1010
      %v1012 = vrot.slane %v1011, 4
      %v1014 = vshll.u32 %v926, 16
      %v1016 = vrot.slane %v1014, 5
      %v1017 = vsel %vm933, %v1012, %v1016
      %v1019 = vshrl.u32 %v927, 16
      %v1021 = vrot.slane %v1019, 4
      %v1022 = vshll.u32 %v927, 16
      %v1024 = vrot.slane %v1022, 5
      %v1025 = vor.u32 %v1021, %v1024
      %v1026 = vrot.slane %v1025, 4
      %v1028 = vshll.u32 %v928, 16
      %v1030 = vrot.slane %v1028, 5
      %v1031 = vsel %vm933, %v1026, %v1030
      %v1033 = vshrl.u32 %v929, 16
      %v1035 = vrot.slane %v1033, 4
      %v1036 = vshll.u32 %v929, 16
      %v1038 = vrot.slane %v1036, 5
      %v1039 = vor.u32 %v1035, %v1038
      %v1040 = vrot.slane %v1039, 4
      %v1042 = vshll.u32 %v930, 16
      %v1044 = vrot.slane %v1042, 5
      %v1045 = vsel %vm933, %v1040, %v1044
      %s1046 = scalar_lea.vmem %s0, 4
      %v1047 = vld [vmem:[%s1046] sm:$0x3]
      %v1048 = vunpack.c.l.b16 %v947
      %v1049 = vunpack.c.l.b16 %v961
      %v1050 = vunpack.c.l.b16 %v975
      %v1051 = vunpack.c.l.b16 %v989
      %v1052 = vunpack.c.l.b16 %v1003
      %v1053 = vunpack.c.l.b16 %v1017
      %v1054 = vunpack.c.l.b16 %v1031
      %v1055 = vunpack.c.l.b16 %v1045
      %v1056 = vpack.c.b16 %v1049, %v1048
      %v1057 = vpack.c.b16 %v1051, %v1050
      %v1058 = vpack.c.b16 %v1053, %v1052
      %v1059 = vpack.c.b16 %v1055, %v1054
      %v1061 = vsel %vm691, %v1056, 0
      %v1064 = vsel %vm691, %v1057, 0
      %v1067 = vsel %vm691, %v1058, 0
      %v1070 = vsel %vm691, %v1059, 0
      %v1073 = vsel %vm704, %v1047, 0
      %1075 = vmatprep.subr.bf16.mxu0 0
      %1076 = vmatpush1.bf16.msra.mxu0 %v1073
      %1077 = vmatprep.subr.bf16.mxu0 0
      %1078 = vmatpush1.bf16.msra.mxu0 0
      %1079 = vmatprep.subr.bf16.mxu0 0
      %1080 = vmatpush1.bf16.msra.mxu0 0
      %1081 = vmatprep.subr.bf16.mxu0 0
      %1082 = vmatpush1.bf16.msra.mxu0 0
      %1083 = vmatprep.subr.bf16.mxu0 0
      %1084 = vmatpush1.bf16.msra.mxu0 0
      %1085 = vmatprep.subr.bf16.mxu0 0
      %1086 = vmatpush1.bf16.msra.mxu0 0
      %1087 = vmatprep.subr.bf16.mxu0 0
      %1088 = vmatpush1.bf16.msra.mxu0 0
      %1089 = vmatprep.subr.bf16.mxu0 0
      %1090 = vmatpush1.bf16.msra.mxu0 0
      %1091 = vmatprep.subr.bf16.mxu0 0
      %1092 = vmatpush1.bf16.msra.mxu0 0
      %1093 = vmatprep.subr.bf16.mxu0 0
      %1094 = vmatpush1.bf16.msra.mxu0 0
      %1095 = vmatprep.subr.bf16.mxu0 0
      %1096 = vmatpush1.bf16.msra.mxu0 0
      %1097 = vmatprep.subr.bf16.mxu0 0
      %1098 = vmatpush1.bf16.msra.mxu0 0
      %1099 = vmatprep.subr.bf16.mxu0 0
      %1100 = vmatpush1.bf16.msra.mxu0 0
      %1101 = vmatprep.subr.bf16.mxu0 0
      %1102 = vmatpush1.bf16.msra.mxu0 0
      %1103 = vmatprep.subr.bf16.mxu0 0
      %1104 = vmatpush1.bf16.msra.mxu0 0
      %1105 = vmatprep.subr.bf16.mxu0 0
      %1106 = vmatpush1.bf16.msra.mxu0 0
      %1107 = vmatprep.mubr.bf16.mxu0 0
      %1108 = vmatmul.mubr.bf16.gmra.mrb[0].mxu0 %v1061
      %v1109 = vpop.f32.mrb[0].mxu0
      %v1110 = vadd.f32 0.0, %v1109
      %v1111 = vpop.f32.mrb[0].mxu0
      %v1112 = vpop.f32.mrb[0].mxu0
      %v1113 = vadd.f32 0.0, %v1112
      %v1114 = vpop.f32.mrb[0].mxu0
      %1115 = vmatprep.mubr.bf16.mxu0 0
      %1116 = vmatmul.mubr.bf16.gmra.mrb[0].mxu0 %v1064
      %v1117 = vpop.f32.mrb[0].mxu0
      %v1118 = vadd.f32 0.0, %v1117
      %v1119 = vpop.f32.mrb[0].mxu0
      %v1120 = vpop.f32.mrb[0].mxu0
      %v1121 = vadd.f32 0.0, %v1120
      %v1122 = vpop.f32.mrb[0].mxu0
      %1123 = vmatprep.mubr.bf16.mxu0 0
      %1124 = vmatmul.mubr.bf16.gmra.mrb[0].mxu0 %v1067
      %v1125 = vpop.f32.mrb[0].mxu0
      %v1126 = vadd.f32 0.0, %v1125
      %v1127 = vpop.f32.mrb[0].mxu0
      %v1128 = vpop.f32.mrb[0].mxu0
      %v1129 = vadd.f32 0.0, %v1128
      %v1130 = vpop.f32.mrb[0].mxu0
      %1131 = vmatprep.mubr.bf16.mxu0 0
      %1132 = vmatmul.mubr.bf16.gmra.mrb[0].mxu0 %v1070
      %v1133 = vpop.f32.mrb[0].mxu0
      %v1134 = vadd.f32 0.0, %v1133
      %v1135 = vpop.f32.mrb[0].mxu0
      %v1136 = vpop.f32.mrb[0].mxu0
      %v1137 = vadd.f32 0.0, %v1136
      %v1138 = vpop.f32.mrb[0].mxu0
      %1139 = vdwg.mxu0
      %v1140 = vld [vmem:[#allocation2] sm:$0xff]
      %v1141 = vld [vmem:[#allocation2 + $0x8] sm:$0xff]
      %v1142 = vld [vmem:[#allocation2 + $0x10] sm:$0xff]
      %v1143 = vld [vmem:[#allocation2 + $0x18] sm:$0xff]
      %v1144 = vld [vmem:[#allocation2 + $0x20] sm:$0xff]
      %v1145 = vld [vmem:[#allocation2 + $0x28] sm:$0xff]
      %v1146 = vld [vmem:[#allocation2 + $0x30] sm:$0xff]
      %v1147 = vld [vmem:[#allocation2 + $0x38] sm:$0xff]
      %v1148 = vadd.f32 %v1140, %v1110
      %v1149 = vadd.f32 %v1141, %v1113
      %v1150 = vadd.f32 %v1142, %v1118
      %v1151 = vadd.f32 %v1143, %v1121
      %v1152 = vadd.f32 %v1144, %v1126
      %v1153 = vadd.f32 %v1145, %v1129
      %v1154 = vadd.f32 %v1146, %v1134
      %v1155 = vadd.f32 %v1147, %v1137
      %1156 = vst [vmem:[#allocation2] sm:$0xff] %v1148
      %1157 = vst [vmem:[#allocation2 + $0x8] sm:$0xff] %v1149
      %1158 = vst [vmem:[#allocation2 + $0x10] sm:$0xff] %v1150
      %1159 = vst [vmem:[#allocation2 + $0x18] sm:$0xff] %v1151
      %1160 = vst [vmem:[#allocation2 + $0x20] sm:$0xff] %v1152
      %1161 = vst [vmem:[#allocation2 + $0x28] sm:$0xff] %v1153
      %1162 = vst [vmem:[#allocation2 + $0x30] sm:$0xff] %v1154
      %1163 = vst [vmem:[#allocation2 + $0x38] sm:$0xff] %v1155
      %v1164 = vld [vmem:[%s623] sm:$0xf]
      %v1165 = vld [vmem:[%s623 + $0x8] sm:$0xf]
      %v1166 = vld [vmem:[%s623 + $0x10] sm:$0xf]
      %v1167 = vld [vmem:[%s623 + $0x18] sm:$0xf]
      %v1168 = vld [vmem:[%s623 + $0x20] sm:$0xf]
      %v1169 = vld [vmem:[%s623 + $0x28] sm:$0xf]
      %v1170 = vld [vmem:[%s623 + $0x30] sm:$0xf]
      %v1171 = vld [vmem:[%s623 + $0x38] sm:$0xf]
      %s1172 = scalar_lea.vmem %s0, 6
      %v1173 = vld [vmem:[%s1172] sm:$0x3]
      %v1182 = vunpack.c.l.b16 %v1164
      %v1183 = vunpack.c.l.b16 %v1165
      %v1184 = vunpack.c.l.b16 %v1166
      %v1185 = vunpack.c.l.b16 %v1167
      %v1186 = vunpack.c.l.b16 %v1168
      %v1187 = vunpack.c.l.b16 %v1169
      %v1188 = vunpack.c.l.b16 %v1170
      %v1189 = vunpack.c.l.b16 %v1171
      %v1190 = vpack.c.b16 %v1183, %v1182
      %v1191 = vpack.c.b16 %v1185, %v1184
      %v1192 = vpack.c.b16 %v1187, %v1186
      %v1193 = vpack.c.b16 %v1189, %v1188
      %v1195 = vsel %vm691, %v1190, 0
      %v1198 = vsel %vm691, %v1191, 0
      %v1201 = vsel %vm691, %v1192, 0
      %v1204 = vsel %vm691, %v1193, 0
      %v1207 = vsel %vm704, %v1173, 0
      %1209 = vmatprep.subr.bf16.mxu0 0
      %1210 = vmatpush1.bf16.msra.mxu0 %v1207
      %1211 = vmatprep.subr.bf16.mxu0 0
      %1212 = vmatpush1.bf16.msra.mxu0 0
      %1213 = vmatprep.subr.bf16.mxu0 0
      %1214 = vmatpush1.bf16.msra.mxu0 0
      %1215 = vmatprep.subr.bf16.mxu0 0
      %1216 = vmatpush1.bf16.msra.mxu0 0
      %1217 = vmatprep.subr.bf16.mxu0 0
      %1218 = vmatpush1.bf16.msra.mxu0 0
      %1219 = vmatprep.subr.bf16.mxu0 0
      %1220 = vmatpush1.bf16.msra.mxu0 0
      %1221 = vmatprep.subr.bf16.mxu0 0
      %1222 = vmatpush1.bf16.msra.mxu0 0
      %1223 = vmatprep.subr.bf16.mxu0 0
      %1224 = vmatpush1.bf16.msra.mxu0 0
      %1225 = vmatprep.subr.bf16.mxu0 0
      %1226 = vmatpush1.bf16.msra.mxu0 0
      %1227 = vmatprep.subr.bf16.mxu0 0
      %1228 = vmatpush1.bf16.msra.mxu0 0
      %1229 = vmatprep.subr.bf16.mxu0 0
      %1230 = vmatpush1.bf16.msra.mxu0 0
      %1231 = vmatprep.subr.bf16.mxu0 0
      %1232 = vmatpush1.bf16.msra.mxu0 0
      %1233 = vmatprep.subr.bf16.mxu0 0
      %1234 = vmatpush1.bf16.msra.mxu0 0
      %1235 = vmatprep.subr.bf16.mxu0 0
      %1236 = vmatpush1.bf16.msra.mxu0 0
      %1237 = vmatprep.subr.bf16.mxu0 0
      %1238 = vmatpush1.bf16.msra.mxu0 0
      %1239 = vmatprep.subr.bf16.mxu0 0
      %1240 = vmatpush1.bf16.msra.mxu0 0
      %1241 = vmatprep.mubr.bf16.mxu0 0
      %1242 = vmatmul.mubr.bf16.gmra.mrb[0].mxu0 %v1195
      %v1243 = vpop.f32.mrb[0].mxu0
      %v1244 = vadd.f32 0.0, %v1243
      %v1245 = vpop.f32.mrb[0].mxu0
      %v1246 = vpop.f32.mrb[0].mxu0
      %v1247 = vadd.f32 0.0, %v1246
      %v1248 = vpop.f32.mrb[0].mxu0
      %1249 = vmatprep.mubr.bf16.mxu0 0
      %1250 = vmatmul.mubr.bf16.gmra.mrb[0].mxu0 %v1198
      %v1251 = vpop.f32.mrb[0].mxu0
      %v1252 = vadd.f32 0.0, %v1251
      %v1253 = vpop.f32.mrb[0].mxu0
      %v1254 = vpop.f32.mrb[0].mxu0
      %v1255 = vadd.f32 0.0, %v1254
      %v1256 = vpop.f32.mrb[0].mxu0
      %1257 = vmatprep.mubr.bf16.mxu0 0
      %1258 = vmatmul.mubr.bf16.gmra.mrb[0].mxu0 %v1201
      %v1259 = vpop.f32.mrb[0].mxu0
      %v1260 = vadd.f32 0.0, %v1259
      %v1261 = vpop.f32.mrb[0].mxu0
      %v1262 = vpop.f32.mrb[0].mxu0
      %v1263 = vadd.f32 0.0, %v1262
      %v1264 = vpop.f32.mrb[0].mxu0
      %1265 = vmatprep.mubr.bf16.mxu0 0
      %1266 = vmatmul.mubr.bf16.gmra.mrb[0].mxu0 %v1204
      %v1267 = vpop.f32.mrb[0].mxu0
      %v1268 = vadd.f32 0.0, %v1267
      %v1269 = vpop.f32.mrb[0].mxu0
      %v1270 = vpop.f32.mrb[0].mxu0
      %v1271 = vadd.f32 0.0, %v1270
      %v1272 = vpop.f32.mrb[0].mxu0
      %1273 = vdwg.mxu0
      %v1274 = vld [vmem:[#allocation2] sm:$0xff]
      %v1275 = vld [vmem:[#allocation2 + $0x8] sm:$0xff]
      %v1276 = vld [vmem:[#allocation2 + $0x10] sm:$0xff]
      %v1277 = vld [vmem:[#allocation2 + $0x18] sm:$0xff]
      %v1278 = vld [vmem:[#allocation2 + $0x20] sm:$0xff]
      %v1279 = vld [vmem:[#allocation2 + $0x28] sm:$0xff]
      %v1280 = vld [vmem:[#allocation2 + $0x30] sm:$0xff]
      %v1281 = vld [vmem:[#allocation2 + $0x38] sm:$0xff]
      %v1282 = vadd.f32 %v1274, %v1244
      %v1283 = vadd.f32 %v1275, %v1247
      %v1284 = vadd.f32 %v1276, %v1252
      %v1285 = vadd.f32 %v1277, %v1255
      %v1286 = vadd.f32 %v1278, %v1260
      %v1287 = vadd.f32 %v1279, %v1263
      %v1288 = vadd.f32 %v1280, %v1268
      %v1289 = vadd.f32 %v1281, %v1271
      %1290 = vst [vmem:[#allocation2] sm:$0xff] %v1282
      %1291 = vst [vmem:[#allocation2 + $0x8] sm:$0xff] %v1283
      %1292 = vst [vmem:[#allocation2 + $0x10] sm:$0xff] %v1284
      %1293 = vst [vmem:[#allocation2 + $0x18] sm:$0xff] %v1285
      %1294 = vst [vmem:[#allocation2 + $0x20] sm:$0xff] %v1286
      %1295 = vst [vmem:[#allocation2 + $0x28] sm:$0xff] %v1287
      %1296 = vst [vmem:[#allocation2 + $0x30] sm:$0xff] %v1288
      %1297 = vst [vmem:[#allocation2 + $0x38] sm:$0xff] %v1289
      %v1298 = vld [vmem:[%s644] sm:$0xf]
      %v1299 = vld [vmem:[%s644 + $0x8] sm:$0xf]
      %v1300 = vld [vmem:[%s644 + $0x10] sm:$0xf]
      %v1301 = vld [vmem:[%s644 + $0x18] sm:$0xf]
      %v1302 = vld [vmem:[%s644 + $0x20] sm:$0xf]
      %v1303 = vld [vmem:[%s644 + $0x28] sm:$0xf]
      %v1304 = vld [vmem:[%s644 + $0x30] sm:$0xf]
      %v1305 = vld [vmem:[%s644 + $0x38] sm:$0xf]
      %s1306 = scalar_lea.vmem %s0, 8
      %v1307 = vld [vmem:[%s1306] sm:$0x3]
      %v1316 = vunpack.c.l.b16 %v1298
      %v1317 = vunpack.c.l.b16 %v1299
      %v1318 = vunpack.c.l.b16 %v1300
      %v1319 = vunpack.c.l.b16 %v1301
      %v1320 = vunpack.c.l.b16 %v1302
      %v1321 = vunpack.c.l.b16 %v1303
      %v1322 = vunpack.c.l.b16 %v1304
      %v1323 = vunpack.c.l.b16 %v1305
      %v1324 = vpack.c.b16 %v1317, %v1316
      %v1325 = vpack.c.b16 %v1319, %v1318
      %v1326 = vpack.c.b16 %v1321, %v1320
      %v1327 = vpack.c.b16 %v1323, %v1322
      %v1329 = vsel %vm691, %v1324, 0
      %v1332 = vsel %vm691, %v1325, 0
      %v1335 = vsel %vm691, %v1326, 0
      %v1338 = vsel %vm691, %v1327, 0
      %v1341 = vsel %vm704, %v1307, 0
      %1343 = vmatprep.subr.bf16.mxu0 0
      %1344 = vmatpush1.bf16.msra.mxu0 %v1341
      %1345 = vmatprep.subr.bf16.mxu0 0
      %1346 = vmatpush1.bf16.msra.mxu0 0
      %1347 = vmatprep.subr.bf16.mxu0 0
      %1348 = vmatpush1.bf16.msra.mxu0 0
      %1349 = vmatprep.subr.bf16.mxu0 0
      %1350 = vmatpush1.bf16.msra.mxu0 0
      %1351 = vmatprep.subr.bf16.mxu0 0
      %1352 = vmatpush1.bf16.msra.mxu0 0
      %1353 = vmatprep.subr.bf16.mxu0 0
      %1354 = vmatpush1.bf16.msra.mxu0 0
      %1355 = vmatprep.subr.bf16.mxu0 0
      %1356 = vmatpush1.bf16.msra.mxu0 0
      %1357 = vmatprep.subr.bf16.mxu0 0
      %1358 = vmatpush1.bf16.msra.mxu0 0
      %1359 = vmatprep.subr.bf16.mxu0 0
      %1360 = vmatpush1.bf16.msra.mxu0 0
      %1361 = vmatprep.subr.bf16.mxu0 0
      %1362 = vmatpush1.bf16.msra.mxu0 0
      %1363 = vmatprep.subr.bf16.mxu0 0
      %1364 = vmatpush1.bf16.msra.mxu0 0
      %1365 = vmatprep.subr.bf16.mxu0 0
      %1366 = vmatpush1.bf16.msra.mxu0 0
      %1367 = vmatprep.subr.bf16.mxu0 0
      %1368 = vmatpush1.bf16.msra.mxu0 0
      %1369 = vmatprep.subr.bf16.mxu0 0
      %1370 = vmatpush1.bf16.msra.mxu0 0
      %1371 = vmatprep.subr.bf16.mxu0 0
      %1372 = vmatpush1.bf16.msra.mxu0 0
      %1373 = vmatprep.subr.bf16.mxu0 0
      %1374 = vmatpush1.bf16.msra.mxu0 0
      %1375 = vmatprep.mubr.bf16.mxu0 0
      %1376 = vmatmul.mubr.bf16.gmra.mrb[0].mxu0 %v1329
      %v1377 = vpop.f32.mrb[0].mxu0
      %v1378 = vadd.f32 0.0, %v1377
      %v1379 = vpop.f32.mrb[0].mxu0
      %v1380 = vpop.f32.mrb[0].mxu0
      %v1381 = vadd.f32 0.0, %v1380
      %v1382 = vpop.f32.mrb[0].mxu0
      %1383 = vmatprep.mubr.bf16.mxu0 0
      %1384 = vmatmul.mubr.bf16.gmra.mrb[0].mxu0 %v1332
      %v1385 = vpop.f32.mrb[0].mxu0
      %v1386 = vadd.f32 0.0, %v1385
      %v1387 = vpop.f32.mrb[0].mxu0
      %v1388 = vpop.f32.mrb[0].mxu0
      %v1389 = vadd.f32 0.0, %v1388
      %v1390 = vpop.f32.mrb[0].mxu0
      %1391 = vmatprep.mubr.bf16.mxu0 0
      %1392 = vmatmul.mubr.bf16.gmra.mrb[0].mxu0 %v1335
      %v1393 = vpop.f32.mrb[0].mxu0
      %v1394 = vadd.f32 0.0, %v1393
      %v1395 = vpop.f32.mrb[0].mxu0
      %v1396 = vpop.f32.mrb[0].mxu0
      %v1397 = vadd.f32 0.0, %v1396
      %v1398 = vpop.f32.mrb[0].mxu0
      %1399 = vmatprep.mubr.bf16.mxu0 0
      %1400 = vmatmul.mubr.bf16.gmra.mrb[0].mxu0 %v1338
      %v1401 = vpop.f32.mrb[0].mxu0
      %v1402 = vadd.f32 0.0, %v1401
      %v1403 = vpop.f32.mrb[0].mxu0
      %v1404 = vpop.f32.mrb[0].mxu0
      %v1405 = vadd.f32 0.0, %v1404
      %v1406 = vpop.f32.mrb[0].mxu0
      %1407 = vdwg.mxu0
      %v1408 = vld [vmem:[#allocation2] sm:$0xff]
      %v1409 = vld [vmem:[#allocation2 + $0x8] sm:$0xff]
      %v1410 = vld [vmem:[#allocation2 + $0x10] sm:$0xff]
      %v1411 = vld [vmem:[#allocation2 + $0x18] sm:$0xff]
      %v1412 = vld [vmem:[#allocation2 + $0x20] sm:$0xff]
      %v1413 = vld [vmem:[#allocation2 + $0x28] sm:$0xff]
      %v1414 = vld [vmem:[#allocation2 + $0x30] sm:$0xff]
      %v1415 = vld [vmem:[#allocation2 + $0x38] sm:$0xff]
      %v1416 = vadd.f32 %v1408, %v1378
      %v1417 = vadd.f32 %v1409, %v1381
      %v1418 = vadd.f32 %v1410, %v1386
      %v1419 = vadd.f32 %v1411, %v1389
      %v1420 = vadd.f32 %v1412, %v1394
      %v1421 = vadd.f32 %v1413, %v1397
      %v1422 = vadd.f32 %v1414, %v1402
      %v1423 = vadd.f32 %v1415, %v1405
      %1424 = vst [vmem:[#allocation2] sm:$0xff] %v1416
      %1425 = vst [vmem:[#allocation2 + $0x8] sm:$0xff] %v1417
      %1426 = vst [vmem:[#allocation2 + $0x10] sm:$0xff] %v1418
      %1427 = vst [vmem:[#allocation2 + $0x18] sm:$0xff] %v1419
      %1428 = vst [vmem:[#allocation2 + $0x20] sm:$0xff] %v1420
      %1429 = vst [vmem:[#allocation2 + $0x28] sm:$0xff] %v1421
      %1430 = vst [vmem:[#allocation2 + $0x30] sm:$0xff] %v1422
      %1431 = vst [vmem:[#allocation2 + $0x38] sm:$0xff] %v1423
      %v1432 = vld [vmem:[%s623] sm:$0xf]
      %v1433 = vld [vmem:[%s623 + $0x4] sm:$0x1]
      %v1434 = vld [vmem:[%s623 + $0x8] sm:$0xf]
      %v1435 = vld [vmem:[%s623 + $0xc] sm:$0x1]
      %v1436 = vld [vmem:[%s623 + $0x10] sm:$0xf]
      %v1437 = vld [vmem:[%s623 + $0x14] sm:$0x1]
      %v1438 = vld [vmem:[%s623 + $0x18] sm:$0xf]
      %v1439 = vld [vmem:[%s623 + $0x1c] sm:$0x1]
      %v1440 = vld [vmem:[%s623 + $0x20] sm:$0xf]
      %v1441 = vld [vmem:[%s623 + $0x24] sm:$0x1]
      %v1442 = vld [vmem:[%s623 + $0x28] sm:$0xf]
      %v1443 = vld [vmem:[%s623 + $0x2c] sm:$0x1]
      %v1444 = vld [vmem:[%s623 + $0x30] sm:$0xf]
      %v1445 = vld [vmem:[%s623 + $0x34] sm:$0x1]
      %v1446 = vld [vmem:[%s623 + $0x38] sm:$0xf]
      %v1447 = vld [vmem:[%s623 + $0x3c] sm:$0x1]
      %v1449 = vshrl.u32 %v1432, 16
      %v1451 = vrot.slane %v1449, 4
      %v1452 = vshll.u32 %v1432, 16
      %v1454 = vrot.slane %v1452, 5
      %v1455 = vor.u32 %v1451, %v1454
      %v1456 = vrot.slane %v1455, 4
      %v1458 = vshll.u32 %v1433, 16
      %v1460 = vrot.slane %v1458, 5
      %v1461 = vsel %vm933, %v1456, %v1460
      %v1463 = vshrl.u32 %v1434, 16
      %v1465 = vrot.slane %v1463, 4
      %v1466 = vshll.u32 %v1434, 16
      %v1468 = vrot.slane %v1466, 5
      %v1469 = vor.u32 %v1465, %v1468
      %v1470 = vrot.slane %v1469, 4
      %v1472 = vshll.u32 %v1435, 16
      %v1474 = vrot.slane %v1472, 5
      %v1475 = vsel %vm933, %v1470, %v1474
      %v1477 = vshrl.u32 %v1436, 16
      %v1479 = vrot.slane %v1477, 4
      %v1480 = vshll.u32 %v1436, 16
      %v1482 = vrot.slane %v1480, 5
      %v1483 = vor.u32 %v1479, %v1482
      %v1484 = vrot.slane %v1483, 4
      %v1486 = vshll.u32 %v1437, 16
      %v1488 = vrot.slane %v1486, 5
      %v1489 = vsel %vm933, %v1484, %v1488
      %v1491 = vshrl.u32 %v1438, 16
      %v1493 = vrot.slane %v1491, 4
      %v1494 = vshll.u32 %v1438, 16
      %v1496 = vrot.slane %v1494, 5
      %v1497 = vor.u32 %v1493, %v1496
      %v1498 = vrot.slane %v1497, 4
      %v1500 = vshll.u32 %v1439, 16
      %v1502 = vrot.slane %v1500, 5
      %v1503 = vsel %vm933, %v1498, %v1502
      %v1505 = vshrl.u32 %v1440, 16
      %v1507 = vrot.slane %v1505, 4
      %v1508 = vshll.u32 %v1440, 16
      %v1510 = vrot.slane %v1508, 5
      %v1511 = vor.u32 %v1507, %v1510
      %v1512 = vrot.slane %v1511, 4
      %v1514 = vshll.u32 %v1441, 16
      %v1516 = vrot.slane %v1514, 5
      %v1517 = vsel %vm933, %v1512, %v1516
      %v1519 = vshrl.u32 %v1442, 16
      %v1521 = vrot.slane %v1519, 4
      %v1522 = vshll.u32 %v1442, 16
      %v1524 = vrot.slane %v1522, 5
      %v1525 = vor.u32 %v1521, %v1524
      %v1526 = vrot.slane %v1525, 4
      %v1528 = vshll.u32 %v1443, 16
      %v1530 = vrot.slane %v1528, 5
      %v1531 = vsel %vm933, %v1526, %v1530
      %v1533 = vshrl.u32 %v1444, 16
      %v1535 = vrot.slane %v1533, 4
      %v1536 = vshll.u32 %v1444, 16
      %v1538 = vrot.slane %v1536, 5
      %v1539 = vor.u32 %v1535, %v1538
      %v1540 = vrot.slane %v1539, 4
      %v1542 = vshll.u32 %v1445, 16
      %v1544 = vrot.slane %v1542, 5
      %v1545 = vsel %vm933, %v1540, %v1544
      %v1547 = vshrl.u32 %v1446, 16
      %v1549 = vrot.slane %v1547, 4
      %v1550 = vshll.u32 %v1446, 16
      %v1552 = vrot.slane %v1550, 5
      %v1553 = vor.u32 %v1549, %v1552
      %v1554 = vrot.slane %v1553, 4
      %v1556 = vshll.u32 %v1447, 16
      %v1558 = vrot.slane %v1556, 5
      %v1559 = vsel %vm933, %v1554, %v1558
      %s1560 = scalar_lea.vmem %s0, 10
      %v1561 = vld [vmem:[%s1560] sm:$0x3]
      %v1562 = vunpack.c.l.b16 %v1461
      %v1563 = vunpack.c.l.b16 %v1475
      %v1564 = vunpack.c.l.b16 %v1489
      %v1565 = vunpack.c.l.b16 %v1503
      %v1566 = vunpack.c.l.b16 %v1517
      %v1567 = vunpack.c.l.b16 %v1531
      %v1568 = vunpack.c.l.b16 %v1545
      %v1569 = vunpack.c.l.b16 %v1559
      %v1570 = vpack.c.b16 %v1563, %v1562
      %v1571 = vpack.c.b16 %v1565, %v1564
      %v1572 = vpack.c.b16 %v1567, %v1566
      %v1573 = vpack.c.b16 %v1569, %v1568
      %v1575 = vsel %vm691, %v1570, 0
      %v1578 = vsel %vm691, %v1571, 0
      %v1581 = vsel %vm691, %v1572, 0
      %v1584 = vsel %vm691, %v1573, 0
      %v1587 = vsel %vm704, %v1561, 0
      %1589 = vmatprep.subr.bf16.mxu0 0
      %1590 = vmatpush1.bf16.msra.mxu0 %v1587
      %1591 = vmatprep.subr.bf16.mxu0 0
      %1592 = vmatpush1.bf16.msra.mxu0 0
      %1593 = vmatprep.subr.bf16.mxu0 0
      %1594 = vmatpush1.bf16.msra.mxu0 0
      %1595 = vmatprep.subr.bf16.mxu0 0
      %1596 = vmatpush1.bf16.msra.mxu0 0
      %1597 = vmatprep.subr.bf16.mxu0 0
      %1598 = vmatpush1.bf16.msra.mxu0 0
      %1599 = vmatprep.subr.bf16.mxu0 0
      %1600 = vmatpush1.bf16.msra.mxu0 0
      %1601 = vmatprep.subr.bf16.mxu0 0
      %1602 = vmatpush1.bf16.msra.mxu0 0
      %1603 = vmatprep.subr.bf16.mxu0 0
      %1604 = vmatpush1.bf16.msra.mxu0 0
      %1605 = vmatprep.subr.bf16.mxu0 0
      %1606 = vmatpush1.bf16.msra.mxu0 0
      %1607 = vmatprep.subr.bf16.mxu0 0
      %1608 = vmatpush1.bf16.msra.mxu0 0
      %1609 = vmatprep.subr.bf16.mxu0 0
      %1610 = vmatpush1.bf16.msra.mxu0 0
      %1611 = vmatprep.subr.bf16.mxu0 0
      %1612 = vmatpush1.bf16.msra.mxu0 0
      %1613 = vmatprep.subr.bf16.mxu0 0
      %1614 = vmatpush1.bf16.msra.mxu0 0
      %1615 = vmatprep.subr.bf16.mxu0 0
      %1616 = vmatpush1.bf16.msra.mxu0 0
      %1617 = vmatprep.subr.bf16.mxu0 0
      %1618 = vmatpush1.bf16.msra.mxu0 0
      %1619 = vmatprep.subr.bf16.mxu0 0
      %1620 = vmatpush1.bf16.msra.mxu0 0
      %1621 = vmatprep.mubr.bf16.mxu0 0
      %1622 = vmatmul.mubr.bf16.gmra.mrb[0].mxu0 %v1575
      %v1623 = vpop.f32.mrb[0].mxu0
      %v1624 = vadd.f32 0.0, %v1623
      %v1625 = vpop.f32.mrb[0].mxu0
      %v1626 = vpop.f32.mrb[0].mxu0
      %v1627 = vadd.f32 0.0, %v1626
      %v1628 = vpop.f32.mrb[0].mxu0
      %1629 = vmatprep.mubr.bf16.mxu0 0
      %1630 = vmatmul.mubr.bf16.gmra.mrb[0].mxu0 %v1578
      %v1631 = vpop.f32.mrb[0].mxu0
      %v1632 = vadd.f32 0.0, %v1631
      %v1633 = vpop.f32.mrb[0].mxu0
      %v1634 = vpop.f32.mrb[0].mxu0
      %v1635 = vadd.f32 0.0, %v1634
      %v1636 = vpop.f32.mrb[0].mxu0
      %1637 = vmatprep.mubr.bf16.mxu0 0
      %1638 = vmatmul.mubr.bf16.gmra.mrb[0].mxu0 %v1581
      %v1639 = vpop.f32.mrb[0].mxu0
      %v1640 = vadd.f32 0.0, %v1639
      %v1641 = vpop.f32.mrb[0].mxu0
      %v1642 = vpop.f32.mrb[0].mxu0
      %v1643 = vadd.f32 0.0, %v1642
      %v1644 = vpop.f32.mrb[0].mxu0
      %1645 = vmatprep.mubr.bf16.mxu0 0
      %1646 = vmatmul.mubr.bf16.gmra.mrb[0].mxu0 %v1584
      %v1647 = vpop.f32.mrb[0].mxu0
      %v1648 = vadd.f32 0.0, %v1647
      %v1649 = vpop.f32.mrb[0].mxu0
      %v1650 = vpop.f32.mrb[0].mxu0
      %v1651 = vadd.f32 0.0, %v1650
      %v1652 = vpop.f32.mrb[0].mxu0
      %1653 = vdwg.mxu0
      %v1654 = vld [vmem:[#allocation2] sm:$0xff]
      %v1655 = vld [vmem:[#allocation2 + $0x8] sm:$0xff]
      %v1656 = vld [vmem:[#allocation2 + $0x10] sm:$0xff]
      %v1657 = vld [vmem:[#allocation2 + $0x18] sm:$0xff]
      %v1658 = vld [vmem:[#allocation2 + $0x20] sm:$0xff]
      %v1659 = vld [vmem:[#allocation2 + $0x28] sm:$0xff]
      %v1660 = vld [vmem:[#allocation2 + $0x30] sm:$0xff]
      %v1661 = vld [vmem:[#allocation2 + $0x38] sm:$0xff]
      %v1662 = vadd.f32 %v1654, %v1624
      %v1663 = vadd.f32 %v1655, %v1627
      %v1664 = vadd.f32 %v1656, %v1632
      %v1665 = vadd.f32 %v1657, %v1635
      %v1666 = vadd.f32 %v1658, %v1640
      %v1667 = vadd.f32 %v1659, %v1643
      %v1668 = vadd.f32 %v1660, %v1648
      %v1669 = vadd.f32 %v1661, %v1651
      %1670 = vst [vmem:[#allocation2] sm:$0xff] %v1662
      %1671 = vst [vmem:[#allocation2 + $0x8] sm:$0xff] %v1663
      %1672 = vst [vmem:[#allocation2 + $0x10] sm:$0xff] %v1664
      %1673 = vst [vmem:[#allocation2 + $0x18] sm:$0xff] %v1665
      %1674 = vst [vmem:[#allocation2 + $0x20] sm:$0xff] %v1666
      %1675 = vst [vmem:[#allocation2 + $0x28] sm:$0xff] %v1667
      %1676 = vst [vmem:[#allocation2 + $0x30] sm:$0xff] %v1668
      %1677 = vst [vmem:[#allocation2 + $0x38] sm:$0xff] %v1669
      %s1678 = scalar_lea.vmem %s555, 8
      %v1679 = vld [vmem:[%s1678] sm:$0xf]
      %v1680 = vld [vmem:[%s1678 + $0x8] sm:$0xf]
      %v1681 = vld [vmem:[%s1678 + $0x10] sm:$0xf]
      %v1682 = vld [vmem:[%s1678 + $0x18] sm:$0xf]
      %v1683 = vld [vmem:[%s1678 + $0x20] sm:$0xf]
      %v1684 = vld [vmem:[%s1678 + $0x28] sm:$0xf]
      %v1685 = vld [vmem:[%s1678 + $0x30] sm:$0xf]
      %v1686 = vld [vmem:[%s572] sm:$0xf]
      %s1687 = scalar_lea.vmem %s0, 12
      %v1688 = vld [vmem:[%s1687] sm:$0x3]
      %v1697 = vunpack.c.l.b16 %v1679
      %v1698 = vunpack.c.l.b16 %v1680
      %v1699 = vunpack.c.l.b16 %v1681
      %v1700 = vunpack.c.l.b16 %v1682
      %v1701 = vunpack.c.l.b16 %v1683
      %v1702 = vunpack.c.l.b16 %v1684
      %v1703 = vunpack.c.l.b16 %v1685
      %v1704 = vunpack.c.l.b16 %v1686
      %v1705 = vpack.c.b16 %v1698, %v1697
      %v1706 = vpack.c.b16 %v1700, %v1699
      %v1707 = vpack.c.b16 %v1702, %v1701
      %v1708 = vpack.c.b16 %v1704, %v1703
      %v1710 = vsel %vm691, %v1705, 0
      %v1713 = vsel %vm691, %v1706, 0
      %v1716 = vsel %vm691, %v1707, 0
      %v1719 = vsel %vm691, %v1708, 0
      %v1722 = vsel %vm704, %v1688, 0
      %1724 = vmatprep.subr.bf16.mxu0 0
      %1725 = vmatpush1.bf16.msra.mxu0 %v1722
      %1726 = vmatprep.subr.bf16.mxu0 0
      %1727 = vmatpush1.bf16.msra.mxu0 0
      %1728 = vmatprep.subr.bf16.mxu0 0
      %1729 = vmatpush1.bf16.msra.mxu0 0
      %1730 = vmatprep.subr.bf16.mxu0 0
      %1731 = vmatpush1.bf16.msra.mxu0 0
      %1732 = vmatprep.subr.bf16.mxu0 0
      %1733 = vmatpush1.bf16.msra.mxu0 0
      %1734 = vmatprep.subr.bf16.mxu0 0
      %1735 = vmatpush1.bf16.msra.mxu0 0
      %1736 = vmatprep.subr.bf16.mxu0 0
      %1737 = vmatpush1.bf16.msra.mxu0 0
      %1738 = vmatprep.subr.bf16.mxu0 0
      %1739 = vmatpush1.bf16.msra.mxu0 0
      %1740 = vmatprep.subr.bf16.mxu0 0
      %1741 = vmatpush1.bf16.msra.mxu0 0
      %1742 = vmatprep.subr.bf16.mxu0 0
      %1743 = vmatpush1.bf16.msra.mxu0 0
      %1744 = vmatprep.subr.bf16.mxu0 0
      %1745 = vmatpush1.bf16.msra.mxu0 0
      %1746 = vmatprep.subr.bf16.mxu0 0
      %1747 = vmatpush1.bf16.msra.mxu0 0
      %1748 = vmatprep.subr.bf16.mxu0 0
      %1749 = vmatpush1.bf16.msra.mxu0 0
      %1750 = vmatprep.subr.bf16.mxu0 0
      %1751 = vmatpush1.bf16.msra.mxu0 0
      %1752 = vmatprep.subr.bf16.mxu0 0
      %1753 = vmatpush1.bf16.msra.mxu0 0
      %1754 = vmatprep.subr.bf16.mxu0 0
      %1755 = vmatpush1.bf16.msra.mxu0 0
      %1756 = vmatprep.mubr.bf16.mxu0 0
      %1757 = vmatmul.mubr.bf16.gmra.mrb[0].mxu0 %v1710
      %v1758 = vpop.f32.mrb[0].mxu0
      %v1759 = vadd.f32 0.0, %v1758
      %v1760 = vpop.f32.mrb[0].mxu0
      %v1761 = vpop.f32.mrb[0].mxu0
      %v1762 = vadd.f32 0.0, %v1761
      %v1763 = vpop.f32.mrb[0].mxu0
      %1764 = vmatprep.mubr.bf16.mxu0 0
      %1765 = vmatmul.mubr.bf16.gmra.mrb[0].mxu0 %v1713
      %v1766 = vpop.f32.mrb[0].mxu0
      %v1767 = vadd.f32 0.0, %v1766
      %v1768 = vpop.f32.mrb[0].mxu0
      %v1769 = vpop.f32.mrb[0].mxu0
      %v1770 = vadd.f32 0.0, %v1769
      %v1771 = vpop.f32.mrb[0].mxu0
      %1772 = vmatprep.mubr.bf16.mxu0 0
      %1773 = vmatmul.mubr.bf16.gmra.mrb[0].mxu0 %v1716
      %v1774 = vpop.f32.mrb[0].mxu0
      %v1775 = vadd.f32 0.0, %v1774
      %v1776 = vpop.f32.mrb[0].mxu0
      %v1777 = vpop.f32.mrb[0].mxu0
      %v1778 = vadd.f32 0.0, %v1777
      %v1779 = vpop.f32.mrb[0].mxu0
      %1780 = vmatprep.mubr.bf16.mxu0 0
      %1781 = vmatmul.mubr.bf16.gmra.mrb[0].mxu0 %v1719
      %v1782 = vpop.f32.mrb[0].mxu0
      %v1783 = vadd.f32 0.0, %v1782
      %v1784 = vpop.f32.mrb[0].mxu0
      %v1785 = vpop.f32.mrb[0].mxu0
      %v1786 = vadd.f32 0.0, %v1785
      %v1787 = vpop.f32.mrb[0].mxu0
      %1788 = vdwg.mxu0
      %v1789 = vld [vmem:[#allocation2] sm:$0xff]
      %v1790 = vld [vmem:[#allocation2 + $0x8] sm:$0xff]
      %v1791 = vld [vmem:[#allocation2 + $0x10] sm:$0xff]
      %v1792 = vld [vmem:[#allocation2 + $0x18] sm:$0xff]
      %v1793 = vld [vmem:[#allocation2 + $0x20] sm:$0xff]
      %v1794 = vld [vmem:[#allocation2 + $0x28] sm:$0xff]
      %v1795 = vld [vmem:[#allocation2 + $0x30] sm:$0xff]
      %v1796 = vld [vmem:[#allocation2 + $0x38] sm:$0xff]
      %v1797 = vadd.f32 %v1789, %v1759
      %v1798 = vadd.f32 %v1790, %v1762
      %v1799 = vadd.f32 %v1791, %v1767
      %v1800 = vadd.f32 %v1792, %v1770
      %v1801 = vadd.f32 %v1793, %v1775
      %v1802 = vadd.f32 %v1794, %v1778
      %v1803 = vadd.f32 %v1795, %v1783
      %v1804 = vadd.f32 %v1796, %v1786
      %1805 = vst [vmem:[#allocation2] sm:$0xff] %v1797
      %1806 = vst [vmem:[#allocation2 + $0x8] sm:$0xff] %v1798
      %1807 = vst [vmem:[#allocation2 + $0x10] sm:$0xff] %v1799
      %1808 = vst [vmem:[#allocation2 + $0x18] sm:$0xff] %v1800
      %1809 = vst [vmem:[#allocation2 + $0x20] sm:$0xff] %v1801
      %1810 = vst [vmem:[#allocation2 + $0x28] sm:$0xff] %v1802
      %1811 = vst [vmem:[#allocation2 + $0x30] sm:$0xff] %v1803
      %1812 = vst [vmem:[#allocation2 + $0x38] sm:$0xff] %v1804
      %s1813 = scalar_lea.vmem %s589, 8
      %v1814 = vld [vmem:[%s1813] sm:$0xf]
      %v1815 = vld [vmem:[%s1813 + $0x8] sm:$0xf]
      %v1816 = vld [vmem:[%s1813 + $0x10] sm:$0xf]
      %v1817 = vld [vmem:[%s1813 + $0x18] sm:$0xf]
      %v1818 = vld [vmem:[%s1813 + $0x20] sm:$0xf]
      %v1819 = vld [vmem:[%s1813 + $0x28] sm:$0xf]
      %v1820 = vld [vmem:[%s1813 + $0x30] sm:$0xf]
      %v1821 = vld [vmem:[%s606] sm:$0xf]
      %s1822 = scalar_lea.vmem %s0, 14
      %v1823 = vld [vmem:[%s1822] sm:$0x3]
      %v1832 = vunpack.c.l.b16 %v1814
      %v1833 = vunpack.c.l.b16 %v1815
      %v1834 = vunpack.c.l.b16 %v1816
      %v1835 = vunpack.c.l.b16 %v1817
      %v1836 = vunpack.c.l.b16 %v1818
      %v1837 = vunpack.c.l.b16 %v1819
      %v1838 = vunpack.c.l.b16 %v1820
      %v1839 = vunpack.c.l.b16 %v1821
      %v1840 = vpack.c.b16 %v1833, %v1832
      %v1841 = vpack.c.b16 %v1835, %v1834
      %v1842 = vpack.c.b16 %v1837, %v1836
      %v1843 = vpack.c.b16 %v1839, %v1838
      %v1845 = vsel %vm691, %v1840, 0
      %v1848 = vsel %vm691, %v1841, 0
      %v1851 = vsel %vm691, %v1842, 0
      %v1854 = vsel %vm691, %v1843, 0
      %v1857 = vsel %vm704, %v1823, 0
      %1859 = vmatprep.subr.bf16.mxu0 0
      %1860 = vmatpush1.bf16.msra.mxu0 %v1857
      %1861 = vmatprep.subr.bf16.mxu0 0
      %1862 = vmatpush1.bf16.msra.mxu0 0
      %1863 = vmatprep.subr.bf16.mxu0 0
      %1864 = vmatpush1.bf16.msra.mxu0 0
      %1865 = vmatprep.subr.bf16.mxu0 0
      %1866 = vmatpush1.bf16.msra.mxu0 0
      %1867 = vmatprep.subr.bf16.mxu0 0
      %1868 = vmatpush1.bf16.msra.mxu0 0
      %1869 = vmatprep.subr.bf16.mxu0 0
      %1870 = vmatpush1.bf16.msra.mxu0 0
      %1871 = vmatprep.subr.bf16.mxu0 0
      %1872 = vmatpush1.bf16.msra.mxu0 0
      %1873 = vmatprep.subr.bf16.mxu0 0
      %1874 = vmatpush1.bf16.msra.mxu0 0
      %1875 = vmatprep.subr.bf16.mxu0 0
      %1876 = vmatpush1.bf16.msra.mxu0 0
      %1877 = vmatprep.subr.bf16.mxu0 0
      %1878 = vmatpush1.bf16.msra.mxu0 0
      %1879 = vmatprep.subr.bf16.mxu0 0
      %1880 = vmatpush1.bf16.msra.mxu0 0
      %1881 = vmatprep.subr.bf16.mxu0 0
      %1882 = vmatpush1.bf16.msra.mxu0 0
      %1883 = vmatprep.subr.bf16.mxu0 0
      %1884 = vmatpush1.bf16.msra.mxu0 0
      %1885 = vmatprep.subr.bf16.mxu0 0
      %1886 = vmatpush1.bf16.msra.mxu0 0
      %1887 = vmatprep.subr.bf16.mxu0 0
      %1888 = vmatpush1.bf16.msra.mxu0 0
      %1889 = vmatprep.subr.bf16.mxu0 0
      %1890 = vmatpush1.bf16.msra.mxu0 0
      %1891 = vmatprep.mubr.bf16.mxu0 0
      %1892 = vmatmul.mubr.bf16.gmra.mrb[0].mxu0 %v1845
      %v1893 = vpop.f32.mrb[0].mxu0
      %v1894 = vadd.f32 0.0, %v1893
      %v1895 = vpop.f32.mrb[0].mxu0
      %v1896 = vpop.f32.mrb[0].mxu0
      %v1897 = vadd.f32 0.0, %v1896
      %v1898 = vpop.f32.mrb[0].mxu0
      %1899 = vmatprep.mubr.bf16.mxu0 0
      %1900 = vmatmul.mubr.bf16.gmra.mrb[0].mxu0 %v1848
      %v1901 = vpop.f32.mrb[0].mxu0
      %v1902 = vadd.f32 0.0, %v1901
      %v1903 = vpop.f32.mrb[0].mxu0
      %v1904 = vpop.f32.mrb[0].mxu0
      %v1905 = vadd.f32 0.0, %v1904
      %v1906 = vpop.f32.mrb[0].mxu0
      %1907 = vmatprep.mubr.bf16.mxu0 0
      %1908 = vmatmul.mubr.bf16.gmra.mrb[0].mxu0 %v1851
      %v1909 = vpop.f32.mrb[0].mxu0
      %v1910 = vadd.f32 0.0, %v1909
      %v1911 = vpop.f32.mrb[0].mxu0
      %v1912 = vpop.f32.mrb[0].mxu0
      %v1913 = vadd.f32 0.0, %v1912
      %v1914 = vpop.f32.mrb[0].mxu0
      %1915 = vmatprep.mubr.bf16.mxu0 0
      %1916 = vmatmul.mubr.bf16.gmra.mrb[0].mxu0 %v1854
      %v1917 = vpop.f32.mrb[0].mxu0
      %v1918 = vadd.f32 0.0, %v1917
      %v1919 = vpop.f32.mrb[0].mxu0
      %v1920 = vpop.f32.mrb[0].mxu0
      %v1921 = vadd.f32 0.0, %v1920
      %v1922 = vpop.f32.mrb[0].mxu0
      %1923 = vdwg.mxu0
      %v1924 = vld [vmem:[#allocation2] sm:$0xff]
      %v1925 = vld [vmem:[#allocation2 + $0x8] sm:$0xff]
      %v1926 = vld [vmem:[#allocation2 + $0x10] sm:$0xff]
      %v1927 = vld [vmem:[#allocation2 + $0x18] sm:$0xff]
      %v1928 = vld [vmem:[#allocation2 + $0x20] sm:$0xff]
      %v1929 = vld [vmem:[#allocation2 + $0x28] sm:$0xff]
      %v1930 = vld [vmem:[#allocation2 + $0x30] sm:$0xff]
      %v1931 = vld [vmem:[#allocation2 + $0x38] sm:$0xff]
      %v1932 = vadd.f32 %v1924, %v1894
      %v1933 = vadd.f32 %v1925, %v1897
      %v1934 = vadd.f32 %v1926, %v1902
      %v1935 = vadd.f32 %v1927, %v1905
      %v1936 = vadd.f32 %v1928, %v1910
      %v1937 = vadd.f32 %v1929, %v1913
      %v1938 = vadd.f32 %v1930, %v1918
      %v1939 = vadd.f32 %v1931, %v1921
      %1940 = vst [vmem:[#allocation2] sm:$0xff] %v1932
      %1941 = vst [vmem:[#allocation2 + $0x8] sm:$0xff] %v1933
      %1942 = vst [vmem:[#allocation2 + $0x10] sm:$0xff] %v1934
      %1943 = vst [vmem:[#allocation2 + $0x18] sm:$0xff] %v1935
      %1944 = vst [vmem:[#allocation2 + $0x20] sm:$0xff] %v1936
      %1945 = vst [vmem:[#allocation2 + $0x28] sm:$0xff] %v1937
      %1946 = vst [vmem:[#allocation2 + $0x30] sm:$0xff] %v1938
      %1947 = vst [vmem:[#allocation2 + $0x38] sm:$0xff] %v1939
      %v1948 = vld [vmem:[%s1678] sm:$0xf]
      %v1949 = vld [vmem:[%s1678 + $0x4] sm:$0x1]
      %v1950 = vld [vmem:[%s1678 + $0x8] sm:$0xf]
      %v1951 = vld [vmem:[%s1678 + $0xc] sm:$0x1]
      %v1952 = vld [vmem:[%s1678 + $0x10] sm:$0xf]
      %v1953 = vld [vmem:[%s1678 + $0x14] sm:$0x1]
      %v1954 = vld [vmem:[%s1678 + $0x18] sm:$0xf]
      %v1955 = vld [vmem:[%s1678 + $0x1c] sm:$0x1]
      %v1956 = vld [vmem:[%s1678 + $0x20] sm:$0xf]
      %v1957 = vld [vmem:[%s1678 + $0x24] sm:$0x1]
      %v1958 = vld [vmem:[%s1678 + $0x28] sm:$0xf]
      %v1959 = vld [vmem:[%s1678 + $0x2c] sm:$0x1]
      %v1960 = vld [vmem:[%s1678 + $0x30] sm:$0xf]
      %v1961 = vld [vmem:[%s1678 + $0x34] sm:$0x1]
      %v1962 = vld [vmem:[%s572] sm:$0xf]
      %v1963 = vld [vmem:[%s572 + $0x4] sm:$0x1]
      %v1965 = vshrl.u32 %v1948, 16
      %v1967 = vrot.slane %v1965, 4
      %v1968 = vshll.u32 %v1948, 16
      %v1970 = vrot.slane %v1968, 5
      %v1971 = vor.u32 %v1967, %v1970
      %v1972 = vrot.slane %v1971, 4
      %v1974 = vshll.u32 %v1949, 16
      %v1976 = vrot.slane %v1974, 5
      %v1977 = vsel %vm933, %v1972, %v1976
      %v1979 = vshrl.u32 %v1950, 16
      %v1981 = vrot.slane %v1979, 4
      %v1982 = vshll.u32 %v1950, 16
      %v1984 = vrot.slane %v1982, 5
      %v1985 = vor.u32 %v1981, %v1984
      %v1986 = vrot.slane %v1985, 4
      %v1988 = vshll.u32 %v1951, 16
      %v1990 = vrot.slane %v1988, 5
      %v1991 = vsel %vm933, %v1986, %v1990
      %v1993 = vshrl.u32 %v1952, 16
      %v1995 = vrot.slane %v1993, 4
      %v1996 = vshll.u32 %v1952, 16
      %v1998 = vrot.slane %v1996, 5
      %v1999 = vor.u32 %v1995, %v1998
      %v2000 = vrot.slane %v1999, 4
      %v2002 = vshll.u32 %v1953, 16
      %v2004 = vrot.slane %v2002, 5
      %v2005 = vsel %vm933, %v2000, %v2004
      %v2007 = vshrl.u32 %v1954, 16
      %v2009 = vrot.slane %v2007, 4
      %v2010 = vshll.u32 %v1954, 16
      %v2012 = vrot.slane %v2010, 5
      %v2013 = vor.u32 %v2009, %v2012
      %v2014 = vrot.slane %v2013, 4
      %v2016 = vshll.u32 %v1955, 16
      %v2018 = vrot.slane %v2016, 5
      %v2019 = vsel %vm933, %v2014, %v2018
      %v2021 = vshrl.u32 %v1956, 16
      %v2023 = vrot.slane %v2021, 4
      %v2024 = vshll.u32 %v1956, 16
      %v2026 = vrot.slane %v2024, 5
      %v2027 = vor.u32 %v2023, %v2026
      %v2028 = vrot.slane %v2027, 4
      %v2030 = vshll.u32 %v1957, 16
      %v2032 = vrot.slane %v2030, 5
      %v2033 = vsel %vm933, %v2028, %v2032
      %v2035 = vshrl.u32 %v1958, 16
      %v2037 = vrot.slane %v2035, 4
      %v2038 = vshll.u32 %v1958, 16
      %v2040 = vrot.slane %v2038, 5
      %v2041 = vor.u32 %v2037, %v2040
      %v2042 = vrot.slane %v2041, 4
      %v2044 = vshll.u32 %v1959, 16
      %v2046 = vrot.slane %v2044, 5
      %v2047 = vsel %vm933, %v2042, %v2046
      %v2049 = vshrl.u32 %v1960, 16
      %v2051 = vrot.slane %v2049, 4
      %v2052 = vshll.u32 %v1960, 16
      %v2054 = vrot.slane %v2052, 5
      %v2055 = vor.u32 %v2051, %v2054
      %v2056 = vrot.slane %v2055, 4
      %v2058 = vshll.u32 %v1961, 16
      %v2060 = vrot.slane %v2058, 5
      %v2061 = vsel %vm933, %v2056, %v2060
      %v2063 = vshrl.u32 %v1962, 16
      %v2065 = vrot.slane %v2063, 4
      %v2066 = vshll.u32 %v1962, 16
      %v2068 = vrot.slane %v2066, 5
      %v2069 = vor.u32 %v2065, %v2068
      %v2070 = vrot.slane %v2069, 4
      %v2072 = vshll.u32 %v1963, 16
      %v2074 = vrot.slane %v2072, 5
      %v2075 = vsel %vm933, %v2070, %v2074
      %s2076 = scalar_lea.vmem %s0, 16
      %v2077 = vld [vmem:[%s2076] sm:$0x3]
      %v2078 = vunpack.c.l.b16 %v1977
      %v2079 = vunpack.c.l.b16 %v1991
      %v2080 = vunpack.c.l.b16 %v2005
      %v2081 = vunpack.c.l.b16 %v2019
      %v2082 = vunpack.c.l.b16 %v2033
      %v2083 = vunpack.c.l.b16 %v2047
      %v2084 = vunpack.c.l.b16 %v2061
      %v2085 = vunpack.c.l.b16 %v2075
      %v2086 = vpack.c.b16 %v2079, %v2078
      %v2087 = vpack.c.b16 %v2081, %v2080
      %v2088 = vpack.c.b16 %v2083, %v2082
      %v2089 = vpack.c.b16 %v2085, %v2084
      %v2091 = vsel %vm691, %v2086, 0
      %v2094 = vsel %vm691, %v2087, 0
      %v2097 = vsel %vm691, %v2088, 0
      %v2100 = vsel %vm691, %v2089, 0
      %v2103 = vsel %vm704, %v2077, 0
      %2105 = vmatprep.subr.bf16.mxu0 0
      %2106 = vmatpush1.bf16.msra.mxu0 %v2103
      %2107 = vmatprep.subr.bf16.mxu0 0
      %2108 = vmatpush1.bf16.msra.mxu0 0
      %2109 = vmatprep.subr.bf16.mxu0 0
      %2110 = vmatpush1.bf16.msra.mxu0 0
      %2111 = vmatprep.subr.bf16.mxu0 0
      %2112 = vmatpush1.bf16.msra.mxu0 0
      %2113 = vmatprep.subr.bf16.mxu0 0
      %2114 = vmatpush1.bf16.msra.mxu0 0
      %2115 = vmatprep.subr.bf16.mxu0 0
      %2116 = vmatpush1.bf16.msra.mxu0 0
      %2117 = vmatprep.subr.bf16.mxu0 0
      %2118 = vmatpush1.bf16.msra.mxu0 0
      %2119 = vmatprep.subr.bf16.mxu0 0
      %2120 = vmatpush1.bf16.msra.mxu0 0
      %2121 = vmatprep.subr.bf16.mxu0 0
      %2122 = vmatpush1.bf16.msra.mxu0 0
      %2123 = vmatprep.subr.bf16.mxu0 0
      %2124 = vmatpush1.bf16.msra.mxu0 0
      %2125 = vmatprep.subr.bf16.mxu0 0
      %2126 = vmatpush1.bf16.msra.mxu0 0
      %2127 = vmatprep.subr.bf16.mxu0 0
      %2128 = vmatpush1.bf16.msra.mxu0 0
      %2129 = vmatprep.subr.bf16.mxu0 0
      %2130 = vmatpush1.bf16.msra.mxu0 0
      %2131 = vmatprep.subr.bf16.mxu0 0
      %2132 = vmatpush1.bf16.msra.mxu0 0
      %2133 = vmatprep.subr.bf16.mxu0 0
      %2134 = vmatpush1.bf16.msra.mxu0 0
      %2135 = vmatprep.subr.bf16.mxu0 0
      %2136 = vmatpush1.bf16.msra.mxu0 0
      %2137 = vmatprep.mubr.bf16.mxu0 0
      %2138 = vmatmul.mubr.bf16.gmra.mrb[0].mxu0 %v2091
      %v2139 = vpop.f32.mrb[0].mxu0
      %v2140 = vadd.f32 0.0, %v2139
      %v2141 = vpop.f32.mrb[0].mxu0
      %v2142 = vpop.f32.mrb[0].mxu0
      %v2143 = vadd.f32 0.0, %v2142
      %v2144 = vpop.f32.mrb[0].mxu0
      %2145 = vmatprep.mubr.bf16.mxu0 0
      %2146 = vmatmul.mubr.bf16.gmra.mrb[0].mxu0 %v2094
      %v2147 = vpop.f32.mrb[0].mxu0
      %v2148 = vadd.f32 0.0, %v2147
      %v2149 = vpop.f32.mrb[0].mxu0
      %v2150 = vpop.f32.mrb[0].mxu0
      %v2151 = vadd.f32 0.0, %v2150
      %v2152 = vpop.f32.mrb[0].mxu0
      %2153 = vmatprep.mubr.bf16.mxu0 0
      %2154 = vmatmul.mubr.bf16.gmra.mrb[0].mxu0 %v2097
      %v2155 = vpop.f32.mrb[0].mxu0
      %v2156 = vadd.f32 0.0, %v2155
      %v2157 = vpop.f32.mrb[0].mxu0
      %v2158 = vpop.f32.mrb[0].mxu0
      %v2159 = vadd.f32 0.0, %v2158
      %v2160 = vpop.f32.mrb[0].mxu0
      %2161 = vmatprep.mubr.bf16.mxu0 0
      %2162 = vmatmul.mubr.bf16.gmra.mrb[0].mxu0 %v2100
      %v2163 = vpop.f32.mrb[0].mxu0
      %v2164 = vadd.f32 0.0, %v2163
      %v2165 = vpop.f32.mrb[0].mxu0
      %v2166 = vpop.f32.mrb[0].mxu0
      %v2167 = vadd.f32 0.0, %v2166
      %v2168 = vpop.f32.mrb[0].mxu0
      %2169 = vdwg.mxu0
      %v2170 = vld [vmem:[#allocation2] sm:$0xff]
      %v2171 = vld [vmem:[#allocation2 + $0x8] sm:$0xff]
      %v2172 = vld [vmem:[#allocation2 + $0x10] sm:$0xff]
      %v2173 = vld [vmem:[#allocation2 + $0x18] sm:$0xff]
      %v2174 = vld [vmem:[#allocation2 + $0x20] sm:$0xff]
      %v2175 = vld [vmem:[#allocation2 + $0x28] sm:$0xff]
      %v2176 = vld [vmem:[#allocation2 + $0x30] sm:$0xff]
      %v2177 = vld [vmem:[#allocation2 + $0x38] sm:$0xff]
      %v2178 = vadd.f32 %v2170, %v2140
      %v2179 = vadd.f32 %v2171, %v2143
      %v2180 = vadd.f32 %v2172, %v2148
      %v2181 = vadd.f32 %v2173, %v2151
      %v2182 = vadd.f32 %v2174, %v2156
      %v2183 = vadd.f32 %v2175, %v2159
      %v2184 = vadd.f32 %v2176, %v2164
      %v2185 = vadd.f32 %v2177, %v2167
      %2186 = vst [vmem:[#allocation2] sm:$0xff] %v2178
      %2187 = vst [vmem:[#allocation2 + $0x8] sm:$0xff] %v2179
      %2188 = vst [vmem:[#allocation2 + $0x10] sm:$0xff] %v2180
      %2189 = vst [vmem:[#allocation2 + $0x18] sm:$0xff] %v2181
      %2190 = vst [vmem:[#allocation2 + $0x20] sm:$0xff] %v2182
      %2191 = vst [vmem:[#allocation2 + $0x28] sm:$0xff] %v2183
      %2192 = vst [vmem:[#allocation2 + $0x30] sm:$0xff] %v2184
      %2193 = vst [vmem:[#allocation2 + $0x38] sm:$0xff] %v2185
      %v2194 = vld [vmem:[#allocation2] sm:$0xff]
      %v2195 = vld [vmem:[#allocation2 + $0x8] sm:$0xff]
      %v2196 = vld [vmem:[#allocation2 + $0x10] sm:$0xff]
      %v2197 = vld [vmem:[#allocation2 + $0x18] sm:$0xff]
      %v2198 = vld [vmem:[#allocation2 + $0x20] sm:$0xff]
      %v2199 = vld [vmem:[#allocation2 + $0x28] sm:$0xff]
      %v2200 = vld [vmem:[#allocation2 + $0x30] sm:$0xff]
      %v2201 = vld [vmem:[#allocation2 + $0x38] sm:$0xff]
      %v2202 = vld [vmem:[%s1] sm:$0x1]
      %v2204 = vlaneseq
      %v2205 = vshrl.u32 %v2204, 7
      %v2206 = vsub.s32 0, %v2205
      %v2207 = vrot.slane %v2202, %v2206
      %v2209 = vadd.f32 %v2194, %v2207
      %v2210 = vadd.f32 %v2195, %v2207
      %v2211 = vadd.f32 %v2196, %v2207
      %v2212 = vadd.f32 %v2197, %v2207
      %v2213 = vadd.f32 %v2198, %v2207
      %v2214 = vadd.f32 %v2199, %v2207
      %v2215 = vadd.f32 %v2200, %v2207
      %v2216 = vadd.f32 %v2201, %v2207
      %v2217 = vmul.f32 %v2209, 0.1
      %v2218 = vmul.f32 %v2210, 0.1
      %v2219 = vmul.f32 %v2211, 0.1
      %v2220 = vmul.f32 %v2212, 0.1
      %v2221 = vmul.f32 %v2213, 0.1
      %v2222 = vmul.f32 %v2214, 0.1
      %v2223 = vmul.f32 %v2215, 0.1
      %v2224 = vmul.f32 %v2216, 0.1
      %v2225 = vmax.f32 %v2209, %v2217
      %v2226 = vmax.f32 %v2210, %v2218
      %v2227 = vmax.f32 %v2211, %v2219
      %v2228 = vmax.f32 %v2212, %v2220
      %v2229 = vmax.f32 %v2213, %v2221
      %v2230 = vmax.f32 %v2214, %v2222
      %v2231 = vmax.f32 %v2215, %v2223
      %v2232 = vmax.f32 %v2216, %v2224
      %v2233 = vpack.c.bf16 %v2226, %v2225
      %v2234 = vpack.c.bf16 %v2228, %v2227
      %v2235 = vpack.c.bf16 %v2230, %v2229
      %v2236 = vpack.c.bf16 %v2232, %v2231
      %v2241 = vunpack.c.l.b16 %v2233
      %v2242 = vunpack.c.h.b16 %v2233
      %v2243 = vunpack.c.l.b16 %v2234
      %v2244 = vunpack.c.h.b16 %v2234
      %v2245 = vunpack.c.l.b16 %v2235
      %v2246 = vunpack.c.h.b16 %v2235
      %v2247 = vunpack.c.l.b16 %v2236
      %v2248 = vunpack.c.h.b16 %v2236
      %v2249 = vpack.c.b16 %v2241, %v2241
      %v2250 = vpack.c.b16 %v2242, %v2242
      %v2251 = vpack.c.b16 %v2243, %v2243
      %v2252 = vpack.c.b16 %v2244, %v2244
      %v2253 = vpack.c.b16 %v2245, %v2245
      %v2254 = vpack.c.b16 %v2246, %v2246
      %v2255 = vpack.c.b16 %v2247, %v2247
      %v2256 = vpack.c.b16 %v2248, %v2248
      %vm2265 = vcmask 60416
      %2266 = vst.msk [vmem:[%s659] sm:$0xf] %vm2265, %v2249
      %2267 = vst.msk [vmem:[%s659 + $0x4] sm:$0xf] %vm2265, %v2250
      %2268 = vst.msk [vmem:[%s659 + $0x8] sm:$0xf] %vm2265, %v2251
      %2269 = vst.msk [vmem:[%s659 + $0xc] sm:$0xf] %vm2265, %v2252
      %2270 = vst.msk [vmem:[%s659 + $0x10] sm:$0xf] %vm2265, %v2253
      %2271 = vst.msk [vmem:[%s659 + $0x14] sm:$0xf] %vm2265, %v2254
      %2272 = vst.msk [vmem:[%s659 + $0x18] sm:$0xf] %vm2265, %v2255
      %2273 = vst.msk [vmem:[%s659 + $0x1c] sm:$0xf] %vm2265, %v2256
      %s2274 = smul.u32 8, %s24
      %p2275 = scmp.lt.s32.totalorder %s23, 1
      %s2276 = scalar_select %p2275, %s23, 1
      %p2277 = scmp.lt.s32.totalorder %s2274, 7
      %s2278 = scalar_select %p2277, %s2274, 7
      %s2279 = smul.addr %s2276, 8
      %s2280 = sadd.s32 %s2278, %s2279
      %s2281 = smul.addr %s2280, 4
      %s2282 = scalar_lea.vmem %s8, %s2281
      // Predicated region
      $region53: #{downsampling_layer_apply.1} parent=51 // pred_check
        %p2283 = pneg %p269
      $region54: #{downsampling_layer_apply.1} parent=51 // pred_check_branch
        %2285 = sbr.rel (%p2283) target = $region56
      $region55: #{downsampling_layer_apply.1} parent=51 // pred_region
        %s2286 = smul.u32 8, %s24
      $region56: #{downsampling_layer_apply.1} parent=51 // pred_fallthru
        _
    $region52: #{downsampling_layer_apply.1} parent=5 // pred_fallthru
      _
    %p2287 = scmp.le.s32.totalorder 2, %s14
    // Predicated region
    $region57: #{downsampling_layer_apply.1} parent=5 // pred_check
      %p2288 = pneg %p2287
    $region58: #{downsampling_layer_apply.1} parent=5 // pred_check_branch
      %2290 = sbr.rel (%p2288) target = $region60
    $region59: #{downsampling_layer_apply.1} parent=5 // pred_region
      %s2291 = ssub.s32 %s14, 2
      // Predicated region
      $region61: #{downsampling_layer_apply.1} parent=59 // pred_check
        %p2292 = pneg %p275
      $region62: #{downsampling_layer_apply.1} parent=59 // pred_check_branch
        %2294 = sbr.rel (%p2292) target = $region64
      $region63: #{downsampling_layer_apply.1} parent=59 // pred_region
        %s2295 = smul.u32 8, %s26
        %p2296 = scmp.lt.s32.totalorder %s25, 1
        %s2297 = scalar_select %p2296, %s25, 1
        %p2298 = scmp.lt.s32.totalorder %s2295, 7
        %s2299 = scalar_select %p2298, %s2295, 7
        %s2300 = smul.addr %s2297, 8
        %s2301 = sadd.s32 %s2299, %s2300
        %s2302 = smul.addr %s2301, 4
        %s2303 = scalar_lea.vmem %s8, %s2302
      $region64: #{downsampling_layer_apply.1} parent=59 // pred_fallthru
        _
    $region60: #{downsampling_layer_apply.1} parent=5 // pred_fallthru
      _
  $region6: #{downsampling_layer_apply.1} parent=0 // loop_footer
    %s18 = sadd.s32 1, %s14
  $region7: #{downsampling_layer_apply.1} parent=0 // loop_footer_branch
    %13 = sbr.rel target = $region3
  $region8: #{downsampling_layer_apply.1} parent=0 // loop_exit
    _

</llo_original>
